<compile_context>
chip_gen: v5e
topology: v5e:2x2
jax: 0.10.0
libtpu: 0.0.40
codegen_flags: <defaults>
</compile_context>

<pallas_src>
import math
import jax
import jax.numpy as jnp
from jax import lax
from jax.experimental import pallas as pl
from jax.experimental.pallas import tpu as pltpu

# ---- synthetic config (small, consistent with the module) ----
VOCAB   = 32
D_EMB   = 32
N_HEAD  = 4
D_HEAD  = D_EMB // N_HEAD
N_LAYER = 2
MAX_LEN = 16
LN_EPS  = 1e-5
NEG_INF = -1e9


# ------------------------------------------------------------------
# Pallas kernel: the FULL encoder stack for one batch element per grid step.
# ------------------------------------------------------------------
def encoder_kernel(pad_ref, x_ref,
                   wqkv_ref, bqkv_ref, wo_ref, bo_ref,
                   ffw_ref, ffb_ref, lng_ref, lnb_ref,
                   o_ref):
    h = x_ref[0].astype(jnp.float32)                              # (S, D)
    # key-padding additive mask, built once (compute-once data, no dense DMA)
    mask_add = jnp.where(pad_ref[0] != 0, NEG_INF, 0.0).astype(jnp.float32)  # (1, S)
    scale = 1.0 / math.sqrt(D_HEAD)

    def layer_norm(z, g, b):
        mu  = jnp.mean(z, axis=-1, keepdims=True)
        var = jnp.mean((z - mu) ** 2, axis=-1, keepdims=True)
        return (z - mu) * lax.rsqrt(var + LN_EPS) * g + b

    for l in range(N_LAYER):                                      # static unroll
        wqkv = wqkv_ref[l]                                        # (D, 3D) bf16
        bqkv = bqkv_ref[l]                                        # (1, 3D) f32
        wo   = wo_ref[l]                                          # (D, D)  bf16
        bo   = bo_ref[l]                                          # (1, D)  f32
        ffw  = ffw_ref[l]                                         # (D, D)  bf16
        ffb  = ffb_ref[l]                                         # (1, D)  f32
        lng  = lng_ref[l]                                         # (2, D)  f32
        lnb  = lnb_ref[l]                                         # (2, D)  f32

        # ---- self-attention: fused QKV projection (one MXU op) ----
        qkv = jnp.dot(h.astype(jnp.bfloat16), wqkv,
                      preferred_element_type=jnp.float32) + bqkv  # (S, 3D) f32
        q = qkv[:, 0:D_EMB] * scale          # fold score scale into q once
        k = qkv[:, D_EMB:2 * D_EMB]
        v = qkv[:, 2 * D_EMB:3 * D_EMB]

        ctx_heads = []
        for hh in range(N_HEAD):             # static unrolled loop over heads
            sl = slice(hh * D_HEAD, (hh + 1) * D_HEAD)
            qh, kh, vh = q[:, sl], k[:, sl], v[:, sl]
            # scores = qh @ kh^T (contract last dims, no explicit transpose)
            s = lax.dot_general(qh, kh, (((1,), (1,)), ((), ())),
                                preferred_element_type=jnp.float32)  # (S, S)
            s = s + mask_add
            s = s - jnp.max(s, axis=-1, keepdims=True)
            p = jnp.exp(s)
            p = p * pl.reciprocal(jnp.sum(p, axis=-1, keepdims=True),
                                  approx=True)
            ctx_heads.append(jnp.dot(p, vh,
                                     preferred_element_type=jnp.float32))
        # concat heads along lanes -> single Wo matmul
        ctx = jnp.concatenate(ctx_heads, axis=-1)                 # (S, D)
        attn = jnp.dot(ctx.astype(jnp.bfloat16), wo,
                       preferred_element_type=jnp.float32) + bo

        h = layer_norm(h + attn, lng[0:1, :], lnb[0:1, :])

        # ---- feedforward (single Linear d_emb -> d_emb, per the module) ----
        ff = jnp.dot(h.astype(jnp.bfloat16), ffw,
                     preferred_element_type=jnp.float32) + ffb
        h = layer_norm(h + ff, lng[1:2, :], lnb[1:2, :])

    o_ref[0] = h.astype(o_ref.dtype)


def encoder_stack_pallas(h0, pad_flags, stacked):
    B, S, D = h0.shape
    wqkv, bqkv, wo, bo, ffw, ffb, lng, lnb = stacked
    L = wqkv.shape[0]
    return pl.pallas_call(
        encoder_kernel,
        out_shape=jax.ShapeDtypeStruct((B, S, D), jnp.float32),
        grid=(B,),
        in_specs=[
            pl.BlockSpec((1, 1, S),     lambda b: (b, 0, 0)),   # pad flags
            pl.BlockSpec((1, S, D),     lambda b: (b, 0, 0)),   # embedded x
            pl.BlockSpec((L, D, 3 * D), lambda b: (0, 0, 0)),   # W_qkv (stacked)
            pl.BlockSpec((L, 1, 3 * D), lambda b: (0, 0, 0)),   # b_qkv
            pl.BlockSpec((L, D, D),     lambda b: (0, 0, 0)),   # W_o
            pl.BlockSpec((L, 1, D),     lambda b: (0, 0, 0)),   # b_o
            pl.BlockSpec((L, D, D),     lambda b: (0, 0, 0)),   # feedforward W
            pl.BlockSpec((L, 1, D),     lambda b: (0, 0, 0)),   # feedforward b
            pl.BlockSpec((L, 2, D),     lambda b: (0, 0, 0)),   # LN gammas
            pl.BlockSpec((L, 2, D),     lambda b: (0, 0, 0)),   # LN betas
        ],
        out_specs=pl.BlockSpec((1, S, D), lambda b: (b, 0, 0)),
        compiler_params=pltpu.CompilerParams(
            dimension_semantics=("parallel",)),
    )(pad_flags, h0, wqkv, bqkv, wo, bo, ffw, ffb, lng, lnb)


# ------------------------------------------------------------------
# Plain-JAX glue: embeddings, positional table, pad flags
# ------------------------------------------------------------------
def make_pos_table(max_len, d_emb):
    pos = jnp.arange(max_len, dtype=jnp.float32)[:, None]
    i   = jnp.arange(d_emb, dtype=jnp.float32)[None, :]
    ang = pos / jnp.power(10000.0, (2.0 * jnp.floor(i / 2.0)) / d_emb)
    return jnp.where((jnp.arange(d_emb) % 2 == 0)[None, :],
                     jnp.sin(ang), jnp.cos(ang)).astype(jnp.float32)


def encoder_forward(x_tok, emb_table, pos_table, stacked):
    B, S = x_tok.shape
    # TODO(synk): InputEmbedding / PositionalEmbedding definitions are not
    # given; using nn.Embedding-style lookup + standard sinusoidal table.
    h0 = (emb_table[x_tok] + pos_table[:S][None, :, :]).astype(jnp.float32)
    # mask = x.eq(0).unsqueeze(1).repeat(1, S, 1)  -> key-padding only;
    # we pass per-token pad flags and expand inside the kernel.
    pad_flags = (x_tok == 0).astype(jnp.int32)[:, None, :]       # (B, 1, S)
    return encoder_stack_pallas(h0, pad_flags, stacked)


# ------------------------------------------------------------------
# Pure-JAX f32 reference (same math, batched) for a correctness check
# ------------------------------------------------------------------
def encoder_forward_ref(x_tok, emb_table, pos_table, layers):
    B, S = x_tok.shape
    add = jnp.where((x_tok == 0)[:, None, None, :], NEG_INF, 0.0).astype(jnp.float32)
    h = (emb_table[x_tok] + pos_table[:S][None, :, :]).astype(jnp.float32)

    def ln(z, g, b):
        mu  = z.mean(-1, keepdims=True)
        var = ((z - mu) ** 2).mean(-1, keepdims=True)
        return (z - mu) / jnp.sqrt(var + LN_EPS) * g + b

    for p in layers:
        q = h @ p["wq"] + p["bq"]
        k = h @ p["wk"] + p["bk"]
        v = h @ p["wv"] + p["bv"]
        qh = q.reshape(B, S, N_HEAD, D_HEAD).transpose(0, 2, 1, 3)
        kh = k.reshape(B, S, N_HEAD, D_HEAD).transpose(0, 2, 1, 3)
        vh = v.reshape(B, S, N_HEAD, D_HEAD).transpose(0, 2, 1, 3)
        s = jnp.einsum("bhqd,bhkd->bhqk", qh, kh) / math.sqrt(D_HEAD) + add
        pr = jax.nn.softmax(s, axis=-1)
        ctx = jnp.einsum("bhqk,bhkd->bhqd", pr, vh)
        ctx = ctx.transpose(0, 2, 1, 3).reshape(B, S, D_EMB)
        attn = ctx @ p["wo"] + p["bo"]
        h = ln(h + attn, p["g1"], p["b1"])
        ff = h @ p["ffw"] + p["ffb"]
        h = ln(h + ff, p["g2"], p["b2"])
    return h


# ------------------------------------------------------------------
# Deterministic parameter init + stacking for the fused kernel
# ------------------------------------------------------------------
def init_layer_params(key):
    ks = jax.random.split(key, 14)
    s = 0.05
    n = lambda k, shape: jax.random.normal(k, shape, jnp.float32)
    return dict(
        wq=n(ks[0], (D_EMB, D_EMB)) * s, wk=n(ks[1], (D_EMB, D_EMB)) * s,
        wv=n(ks[2], (D_EMB, D_EMB)) * s, wo=n(ks[3], (D_EMB, D_EMB)) * s,
        bq=n(ks[4], (D_EMB,)) * s, bk=n(ks[5], (D_EMB,)) * s,
        bv=n(ks[6], (D_EMB,)) * s, bo=n(ks[7], (D_EMB,)) * s,
        ffw=n(ks[8], (D_EMB, D_EMB)) * s, ffb=n(ks[9], (D_EMB,)) * s,
        g1=1.0 + n(ks[10], (D_EMB,)) * s, b1=n(ks[11], (D_EMB,)) * s,
        g2=1.0 + n(ks[12], (D_EMB,)) * s, b2=n(ks[13], (D_EMB,)) * s,
    )


def stack_params(layers):
    # Weight matrices stored in bf16 (MXU-native on v6e/v7x, halves DMA);
    # biases / LayerNorm params stay f32 (elementwise path).
    wqkv = jnp.stack([jnp.concatenate([p["wq"], p["wk"], p["wv"]], axis=1)
                      for p in layers]).astype(jnp.bfloat16)          # (L, D, 3D)
    bqkv = jnp.stack([jnp.concatenate([p["bq"], p["bk"], p["bv"]])[None, :]
                      for p in layers]).astype(jnp.float32)           # (L, 1, 3D)
    wo  = jnp.stack([p["wo"] for p in layers]).astype(jnp.bfloat16)   # (L, D, D)
    bo  = jnp.stack([p["bo"][None, :] for p in layers]).astype(jnp.float32)
    ffw = jnp.stack([p["ffw"] for p in layers]).astype(jnp.bfloat16)  # (L, D, D)
    ffb = jnp.stack([p["ffb"][None, :] for p in layers]).astype(jnp.float32)
    lng = jnp.stack([jnp.stack([p["g1"], p["g2"]]) for p in layers]).astype(jnp.float32)
    lnb = jnp.stack([jnp.stack([p["b1"], p["b2"]]) for p in layers]).astype(jnp.float32)
    return (wqkv, bqkv, wo, bo, ffw, ffb, lng, lnb)


if __name__ == "__main__":
    key = jax.random.PRNGKey(0)
    B, S = 2, 8
    k1, k2, k3 = jax.random.split(key, 3)

    x_tok = jax.random.randint(k1, (B, S), 1, VOCAB).astype(jnp.int32)
    # introduce padding tokens (id 0) so the mask is non-trivial
    x_tok = x_tok.at[:, -3:].set(0)

    emb_table = jax.random.normal(k2, (VOCAB, D_EMB), jnp.float32)
    pos_table = make_pos_table(MAX_LEN, D_EMB)
    layers = [init_layer_params(k) for k in jax.random.split(k3, N_LAYER)]
    stacked = stack_params(layers)

    out = encoder_forward(x_tok, emb_table, pos_table, stacked)
    out = jax.block_until_ready(out)

    ref = encoder_forward_ref(x_tok, emb_table, pos_table, layers)

    assert out.shape == (B, S, D_EMB)
    assert bool(jnp.all(jnp.isfinite(out)))
    # Tolerance covers bf16 matmul inputs + approx EUP reciprocal vs the
    # pure-f32 reference (errors observed well below this bound).
    assert bool(jnp.allclose(out, ref, rtol=2e-2, atol=2e-2)), \
        "Pallas output does not match JAX reference"
    print("KERNEL_OK")
</pallas_src>

<mosaic_0001>
module attributes {stable_mosaic.version = 11 : i64} {
  func.func @encoder_kernel(%arg0: i32, %arg1: memref<1x1x8xi32, #tpu.memory_space<vmem>>, %arg2: memref<1x8x32xf32, #tpu.memory_space<vmem>>, %arg3: memref<2x32x96xbf16, #tpu.memory_space<vmem>>, %arg4: memref<2x1x96xf32, #tpu.memory_space<vmem>>, %arg5: memref<2x32x32xbf16, #tpu.memory_space<vmem>>, %arg6: memref<2x1x32xf32, #tpu.memory_space<vmem>>, %arg7: memref<2x32x32xbf16, #tpu.memory_space<vmem>>, %arg8: memref<2x1x32xf32, #tpu.memory_space<vmem>>, %arg9: memref<2x2x32xf32, #tpu.memory_space<vmem>>, %arg10: memref<2x2x32xf32, #tpu.memory_space<vmem>>, %arg11: memref<1x8x32xf32, #tpu.memory_space<vmem>>) attributes {dimension_semantics = [#tpu.dimension_semantics<parallel>], iteration_bounds = array<i64: 2>, scalar_prefetch = 0 : i64, scratch_operands = 0 : i64, tpu.core_type = #tpu.core_type<tc>, window_params = [{transform_indices = @transform_0, window_bounds = array<i64: 1, 1, 8>}, {transform_indices = @transform_1, window_bounds = array<i64: 1, 8, 32>}, {pipeline_mode = #tpu.pipeline_mode<synchronous>, transform_indices = @transform_2, window_bounds = array<i64: 2, 32, 96>}, {pipeline_mode = #tpu.pipeline_mode<synchronous>, transform_indices = @transform_3, window_bounds = array<i64: 2, 1, 96>}, {pipeline_mode = #tpu.pipeline_mode<synchronous>, transform_indices = @transform_4, window_bounds = array<i64: 2, 32, 32>}, {pipeline_mode = #tpu.pipeline_mode<synchronous>, transform_indices = @transform_5, window_bounds = array<i64: 2, 1, 32>}, {pipeline_mode = #tpu.pipeline_mode<synchronous>, transform_indices = @transform_6, window_bounds = array<i64: 2, 32, 32>}, {pipeline_mode = #tpu.pipeline_mode<synchronous>, transform_indices = @transform_7, window_bounds = array<i64: 2, 1, 32>}, {pipeline_mode = #tpu.pipeline_mode<synchronous>, transform_indices = @transform_8, window_bounds = array<i64: 2, 2, 32>}, {pipeline_mode = #tpu.pipeline_mode<synchronous>, transform_indices = @transform_9, window_bounds = array<i64: 2, 2, 32>}, {transform_indices = @transform_10, window_bounds = array<i64: 1, 8, 32>}]} {
    %c0 = arith.constant 0 : index
    %c0_0 = arith.constant 0 : index
    %c0_1 = arith.constant 0 : index
    %0 = vector.load %arg2[%c0, %c0_0, %c0_1] : memref<1x8x32xf32, #tpu.memory_space<vmem>>, vector<1x8x32xf32>
    %1 = vector.shape_cast %0 : vector<1x8x32xf32> to vector<8x32xf32>
    %c0_2 = arith.constant 0 : index
    %c0_3 = arith.constant 0 : index
    %c0_4 = arith.constant 0 : index
    %2 = vector.load %arg1[%c0_2, %c0_3, %c0_4] : memref<1x1x8xi32, #tpu.memory_space<vmem>>, vector<1x1x8xi32>
    %3 = vector.shape_cast %2 : vector<1x1x8xi32> to vector<1x8xi32>
    %c0_i32 = arith.constant 0 : i32
    %4 = vector.broadcast %c0_i32 : i32 to vector<1x8xi32>
    %5 = arith.cmpi ne, %3, %4 : vector<1x8xi32>
    %cst = arith.constant -1.000000e+09 : f32
    %cst_5 = arith.constant 0.000000e+00 : f32
    %6 = vector.broadcast %cst : f32 to vector<1x8xf32>
    %7 = vector.broadcast %cst_5 : f32 to vector<1x8xf32>
    %8 = arith.select %5, %6, %7 : vector<1x8xi1>, vector<1x8xf32>
    %c0_6 = arith.constant 0 : index
    %c0_7 = arith.constant 0 : index
    %c0_8 = arith.constant 0 : index
    %9 = vector.load %arg3[%c0_6, %c0_7, %c0_8] : memref<2x32x96xbf16, #tpu.memory_space<vmem>>, vector<1x32x96xbf16>
    %10 = vector.shape_cast %9 : vector<1x32x96xbf16> to vector<32x96xbf16>
    %c0_9 = arith.constant 0 : index
    %c0_10 = arith.constant 0 : index
    %c0_11 = arith.constant 0 : index
    %11 = vector.load %arg4[%c0_9, %c0_10, %c0_11] : memref<2x1x96xf32, #tpu.memory_space<vmem>>, vector<1x1x96xf32>
    %12 = vector.shape_cast %11 : vector<1x1x96xf32> to vector<1x96xf32>
    %c0_12 = arith.constant 0 : index
    %c0_13 = arith.constant 0 : index
    %c0_14 = arith.constant 0 : index
    %13 = vector.load %arg5[%c0_12, %c0_13, %c0_14] : memref<2x32x32xbf16, #tpu.memory_space<vmem>>, vector<1x32x32xbf16>
    %14 = vector.shape_cast %13 : vector<1x32x32xbf16> to vector<32x32xbf16>
    %c0_15 = arith.constant 0 : index
    %c0_16 = arith.constant 0 : index
    %c0_17 = arith.constant 0 : index
    %15 = vector.load %arg6[%c0_15, %c0_16, %c0_17] : memref<2x1x32xf32, #tpu.memory_space<vmem>>, vector<1x1x32xf32>
    %16 = vector.shape_cast %15 : vector<1x1x32xf32> to vector<1x32xf32>
    %c0_18 = arith.constant 0 : index
    %c0_19 = arith.constant 0 : index
    %c0_20 = arith.constant 0 : index
    %17 = vector.load %arg7[%c0_18, %c0_19, %c0_20] : memref<2x32x32xbf16, #tpu.memory_space<vmem>>, vector<1x32x32xbf16>
    %18 = vector.shape_cast %17 : vector<1x32x32xbf16> to vector<32x32xbf16>
    %c0_21 = arith.constant 0 : index
    %c0_22 = arith.constant 0 : index
    %c0_23 = arith.constant 0 : index
    %19 = vector.load %arg8[%c0_21, %c0_22, %c0_23] : memref<2x1x32xf32, #tpu.memory_space<vmem>>, vector<1x1x32xf32>
    %20 = vector.shape_cast %19 : vector<1x1x32xf32> to vector<1x32xf32>
    %c0_24 = arith.constant 0 : index
    %c0_25 = arith.constant 0 : index
    %c0_26 = arith.constant 0 : index
    %21 = vector.load %arg9[%c0_24, %c0_25, %c0_26] : memref<2x2x32xf32, #tpu.memory_space<vmem>>, vector<1x2x32xf32>
    %22 = vector.shape_cast %21 : vector<1x2x32xf32> to vector<2x32xf32>
    %c0_27 = arith.constant 0 : index
    %c0_28 = arith.constant 0 : index
    %c0_29 = arith.constant 0 : index
    %23 = vector.load %arg10[%c0_27, %c0_28, %c0_29] : memref<2x2x32xf32, #tpu.memory_space<vmem>>, vector<1x2x32xf32>
    %24 = vector.shape_cast %23 : vector<1x2x32xf32> to vector<2x32xf32>
    %25 = arith.truncf %1 : vector<8x32xf32> to vector<8x32xbf16>
    %cst_30 = arith.constant dense<0.000000e+00> : vector<8x96xf32>
    %26 = tpu.matmul %25, %10, %cst_30 {dimension_numbers = #tpu.dot_dimension_numbers<[1], [0], [0], [1], [0, 0, 1, 1], [], []>} : vector<8x32xbf16>, vector<32x96xbf16>, vector<8x96xf32> -> vector<8x96xf32>
    %27 = vector.broadcast %12 : vector<1x96xf32> to vector<8x96xf32>
    %28 = arith.addf %26, %27 : vector<8x96xf32>
    %29 = vector.extract_strided_slice %28 {offsets = [0, 0], sizes = [8, 32], strides = [1, 1]} : vector<8x96xf32> to vector<8x32xf32>
    %cst_31 = arith.constant 0.353553385 : f32
    %30 = vector.broadcast %cst_31 : f32 to vector<8x32xf32>
    %31 = arith.mulf %29, %30 : vector<8x32xf32>
    %32 = vector.extract_strided_slice %28 {offsets = [0, 32], sizes = [8, 32], strides = [1, 1]} : vector<8x96xf32> to vector<8x32xf32>
    %33 = vector.extract_strided_slice %28 {offsets = [0, 64], sizes = [8, 32], strides = [1, 1]} : vector<8x96xf32> to vector<8x32xf32>
    %34 = vector.extract_strided_slice %31 {offsets = [0, 0], sizes = [8, 8], strides = [1, 1]} : vector<8x32xf32> to vector<8x8xf32>
    %35 = vector.extract_strided_slice %32 {offsets = [0, 0], sizes = [8, 8], strides = [1, 1]} : vector<8x32xf32> to vector<8x8xf32>
    %36 = vector.extract_strided_slice %33 {offsets = [0, 0], sizes = [8, 8], strides = [1, 1]} : vector<8x32xf32> to vector<8x8xf32>
    %cst_32 = arith.constant dense<0.000000e+00> : vector<8x8xf32>
    %37 = tpu.matmul %34, %35, %cst_32 {dimension_numbers = #tpu.dot_dimension_numbers<[1], [1], [0], [0], [0, 0, 1, 0], [], []>} : vector<8x8xf32>, vector<8x8xf32>, vector<8x8xf32> -> vector<8x8xf32>
    %38 = vector.broadcast %8 : vector<1x8xf32> to vector<8x8xf32>
    %39 = arith.addf %37, %38 : vector<8x8xf32>
    %cst_33 = arith.constant dense<0xFF800000> : vector<8xf32>
    %40 = vector.multi_reduction <maximumf>, %39, %cst_33 [1] : vector<8x8xf32> to vector<8xf32>
    %41 = vector.shape_cast %40 : vector<8xf32> to vector<8x1xf32>
    %42 = vector.broadcast %41 : vector<8x1xf32> to vector<8x8xf32>
    %43 = arith.subf %39, %42 : vector<8x8xf32>
    %44 = math.exp %43 : vector<8x8xf32>
    %cst_34 = arith.constant dense<0.000000e+00> : vector<8xf32>
    %45 = vector.multi_reduction <add>, %44, %cst_34 [1] : vector<8x8xf32> to vector<8xf32>
    %46 = vector.shape_cast %45 : vector<8xf32> to vector<8x1xf32>
    %47 = tpu.reciprocal %46 {approx = true} : vector<8x1xf32> -> vector<8x1xf32>
    %48 = vector.broadcast %47 : vector<8x1xf32> to vector<8x8xf32>
    %49 = arith.mulf %44, %48 : vector<8x8xf32>
    %cst_35 = arith.constant dense<0.000000e+00> : vector<8x8xf32>
    %50 = tpu.matmul %49, %36, %cst_35 {dimension_numbers = #tpu.dot_dimension_numbers<[1], [0], [0], [1], [0, 0, 1, 1], [], []>} : vector<8x8xf32>, vector<8x8xf32>, vector<8x8xf32> -> vector<8x8xf32>
    %51 = vector.extract_strided_slice %31 {offsets = [0, 8], sizes = [8, 8], strides = [1, 1]} : vector<8x32xf32> to vector<8x8xf32>
    %52 = vector.extract_strided_slice %32 {offsets = [0, 8], sizes = [8, 8], strides = [1, 1]} : vector<8x32xf32> to vector<8x8xf32>
    %53 = vector.extract_strided_slice %33 {offsets = [0, 8], sizes = [8, 8], strides = [1, 1]} : vector<8x32xf32> to vector<8x8xf32>
    %cst_36 = arith.constant dense<0.000000e+00> : vector<8x8xf32>
    %54 = tpu.matmul %51, %52, %cst_36 {dimension_numbers = #tpu.dot_dimension_numbers<[1], [1], [0], [0], [0, 0, 1, 0], [], []>} : vector<8x8xf32>, vector<8x8xf32>, vector<8x8xf32> -> vector<8x8xf32>
    %55 = vector.broadcast %8 : vector<1x8xf32> to vector<8x8xf32>
    %56 = arith.addf %54, %55 : vector<8x8xf32>
    %cst_37 = arith.constant dense<0xFF800000> : vector<8xf32>
    %57 = vector.multi_reduction <maximumf>, %56, %cst_37 [1] : vector<8x8xf32> to vector<8xf32>
    %58 = vector.shape_cast %57 : vector<8xf32> to vector<8x1xf32>
    %59 = vector.broadcast %58 : vector<8x1xf32> to vector<8x8xf32>
    %60 = arith.subf %56, %59 : vector<8x8xf32>
    %61 = math.exp %60 : vector<8x8xf32>
    %cst_38 = arith.constant dense<0.000000e+00> : vector<8xf32>
    %62 = vector.multi_reduction <add>, %61, %cst_38 [1] : vector<8x8xf32> to vector<8xf32>
    %63 = vector.shape_cast %62 : vector<8xf32> to vector<8x1xf32>
    %64 = tpu.reciprocal %63 {approx = true} : vector<8x1xf32> -> vector<8x1xf32>
    %65 = vector.broadcast %64 : vector<8x1xf32> to vector<8x8xf32>
    %66 = arith.mulf %61, %65 : vector<8x8xf32>
    %cst_39 = arith.constant dense<0.000000e+00> : vector<8x8xf32>
    %67 = tpu.matmul %66, %53, %cst_39 {dimension_numbers = #tpu.dot_dimension_numbers<[1], [0], [0], [1], [0, 0, 1, 1], [], []>} : vector<8x8xf32>, vector<8x8xf32>, vector<8x8xf32> -> vector<8x8xf32>
    %68 = vector.extract_strided_slice %31 {offsets = [0, 16], sizes = [8, 8], strides = [1, 1]} : vector<8x32xf32> to vector<8x8xf32>
    %69 = vector.extract_strided_slice %32 {offsets = [0, 16], sizes = [8, 8], strides = [1, 1]} : vector<8x32xf32> to vector<8x8xf32>
    %70 = vector.extract_strided_slice %33 {offsets = [0, 16], sizes = [8, 8], strides = [1, 1]} : vector<8x32xf32> to vector<8x8xf32>
    %cst_40 = arith.constant dense<0.000000e+00> : vector<8x8xf32>
    %71 = tpu.matmul %68, %69, %cst_40 {dimension_numbers = #tpu.dot_dimension_numbers<[1], [1], [0], [0], [0, 0, 1, 0], [], []>} : vector<8x8xf32>, vector<8x8xf32>, vector<8x8xf32> -> vector<8x8xf32>
    %72 = vector.broadcast %8 : vector<1x8xf32> to vector<8x8xf32>
    %73 = arith.addf %71, %72 : vector<8x8xf32>
    %cst_41 = arith.constant dense<0xFF800000> : vector<8xf32>
    %74 = vector.multi_reduction <maximumf>, %73, %cst_41 [1] : vector<8x8xf32> to vector<8xf32>
    %75 = vector.shape_cast %74 : vector<8xf32> to vector<8x1xf32>
    %76 = vector.broadcast %75 : vector<8x1xf32> to vector<8x8xf32>
    %77 = arith.subf %73, %76 : vector<8x8xf32>
    %78 = math.exp %77 : vector<8x8xf32>
    %cst_42 = arith.constant dense<0.000000e+00> : vector<8xf32>
    %79 = vector.multi_reduction <add>, %78, %cst_42 [1] : vector<8x8xf32> to vector<8xf32>
    %80 = vector.shape_cast %79 : vector<8xf32> to vector<8x1xf32>
    %81 = tpu.reciprocal %80 {approx = true} : vector<8x1xf32> -> vector<8x1xf32>
    %82 = vector.broadcast %81 : vector<8x1xf32> to vector<8x8xf32>
    %83 = arith.mulf %78, %82 : vector<8x8xf32>
    %cst_43 = arith.constant dense<0.000000e+00> : vector<8x8xf32>
    %84 = tpu.matmul %83, %70, %cst_43 {dimension_numbers = #tpu.dot_dimension_numbers<[1], [0], [0], [1], [0, 0, 1, 1], [], []>} : vector<8x8xf32>, vector<8x8xf32>, vector<8x8xf32> -> vector<8x8xf32>
    %85 = vector.extract_strided_slice %31 {offsets = [0, 24], sizes = [8, 8], strides = [1, 1]} : vector<8x32xf32> to vector<8x8xf32>
    %86 = vector.extract_strided_slice %32 {offsets = [0, 24], sizes = [8, 8], strides = [1, 1]} : vector<8x32xf32> to vector<8x8xf32>
    %87 = vector.extract_strided_slice %33 {offsets = [0, 24], sizes = [8, 8], strides = [1, 1]} : vector<8x32xf32> to vector<8x8xf32>
    %cst_44 = arith.constant dense<0.000000e+00> : vector<8x8xf32>
    %88 = tpu.matmul %85, %86, %cst_44 {dimension_numbers = #tpu.dot_dimension_numbers<[1], [1], [0], [0], [0, 0, 1, 0], [], []>} : vector<8x8xf32>, vector<8x8xf32>, vector<8x8xf32> -> vector<8x8xf32>
    %89 = vector.broadcast %8 : vector<1x8xf32> to vector<8x8xf32>
    %90 = arith.addf %88, %89 : vector<8x8xf32>
    %cst_45 = arith.constant dense<0xFF800000> : vector<8xf32>
    %91 = vector.multi_reduction <maximumf>, %90, %cst_45 [1] : vector<8x8xf32> to vector<8xf32>
    %92 = vector.shape_cast %91 : vector<8xf32> to vector<8x1xf32>
    %93 = vector.broadcast %92 : vector<8x1xf32> to vector<8x8xf32>
    %94 = arith.subf %90, %93 : vector<8x8xf32>
    %95 = math.exp %94 : vector<8x8xf32>
    %cst_46 = arith.constant dense<0.000000e+00> : vector<8xf32>
    %96 = vector.multi_reduction <add>, %95, %cst_46 [1] : vector<8x8xf32> to vector<8xf32>
    %97 = vector.shape_cast %96 : vector<8xf32> to vector<8x1xf32>
    %98 = tpu.reciprocal %97 {approx = true} : vector<8x1xf32> -> vector<8x1xf32>
    %99 = vector.broadcast %98 : vector<8x1xf32> to vector<8x8xf32>
    %100 = arith.mulf %95, %99 : vector<8x8xf32>
    %cst_47 = arith.constant dense<0.000000e+00> : vector<8x8xf32>
    %101 = tpu.matmul %100, %87, %cst_47 {dimension_numbers = #tpu.dot_dimension_numbers<[1], [0], [0], [1], [0, 0, 1, 1], [], []>} : vector<8x8xf32>, vector<8x8xf32>, vector<8x8xf32> -> vector<8x8xf32>
    %102 = tpu.concatenate %50, %67, %84, %101 in 1 : vector<8x8xf32>, vector<8x8xf32>, vector<8x8xf32>, vector<8x8xf32> -> vector<8x32xf32>
    %103 = arith.truncf %102 : vector<8x32xf32> to vector<8x32xbf16>
    %cst_48 = arith.constant dense<0.000000e+00> : vector<8x32xf32>
    %104 = tpu.matmul %103, %14, %cst_48 {dimension_numbers = #tpu.dot_dimension_numbers<[1], [0], [0], [1], [0, 0, 1, 1], [], []>} : vector<8x32xbf16>, vector<32x32xbf16>, vector<8x32xf32> -> vector<8x32xf32>
    %105 = vector.broadcast %16 : vector<1x32xf32> to vector<8x32xf32>
    %106 = arith.addf %104, %105 : vector<8x32xf32>
    %107 = arith.addf %1, %106 : vector<8x32xf32>
    %108 = vector.extract_strided_slice %22 {offsets = [0, 0], sizes = [1, 32], strides = [1, 1]} : vector<2x32xf32> to vector<1x32xf32>
    %109 = vector.extract_strided_slice %24 {offsets = [0, 0], sizes = [1, 32], strides = [1, 1]} : vector<2x32xf32> to vector<1x32xf32>
    %cst_49 = arith.constant dense<0.000000e+00> : vector<8xf32>
    %110 = vector.multi_reduction <add>, %107, %cst_49 [1] : vector<8x32xf32> to vector<8xf32>
    %111 = vector.shape_cast %110 : vector<8xf32> to vector<8x1xf32>
    %cst_50 = arith.constant 3.200000e+01 : f32
    %112 = vector.broadcast %cst_50 : f32 to vector<8x1xf32>
    %113 = arith.divf %111, %112 : vector<8x1xf32>
    %114 = vector.broadcast %113 : vector<8x1xf32> to vector<8x32xf32>
    %115 = arith.subf %107, %114 : vector<8x32xf32>
    %116 = arith.mulf %115, %115 : vector<8x32xf32>
    %cst_51 = arith.constant dense<0.000000e+00> : vector<8xf32>
    %117 = vector.multi_reduction <add>, %116, %cst_51 [1] : vector<8x32xf32> to vector<8xf32>
    %118 = vector.shape_cast %117 : vector<8xf32> to vector<8x1xf32>
    %cst_52 = arith.constant 3.200000e+01 : f32
    %119 = vector.broadcast %cst_52 : f32 to vector<8x1xf32>
    %120 = arith.divf %118, %119 : vector<8x1xf32>
    %121 = vector.broadcast %113 : vector<8x1xf32> to vector<8x32xf32>
    %122 = arith.subf %107, %121 : vector<8x32xf32>
    %cst_53 = arith.constant 9.99999974E-6 : f32
    %123 = vector.broadcast %cst_53 : f32 to vector<8x1xf32>
    %124 = arith.addf %120, %123 : vector<8x1xf32>
    %125 = math.rsqrt %124 : vector<8x1xf32>
    %126 = vector.broadcast %125 : vector<8x1xf32> to vector<8x32xf32>
    %127 = arith.mulf %122, %126 : vector<8x32xf32>
    %128 = vector.broadcast %108 : vector<1x32xf32> to vector<8x32xf32>
    %129 = arith.mulf %127, %128 : vector<8x32xf32>
    %130 = vector.broadcast %109 : vector<1x32xf32> to vector<8x32xf32>
    %131 = arith.addf %129, %130 : vector<8x32xf32>
    %132 = arith.truncf %131 : vector<8x32xf32> to vector<8x32xbf16>
    %cst_54 = arith.constant dense<0.000000e+00> : vector<8x32xf32>
    %133 = tpu.matmul %132, %18, %cst_54 {dimension_numbers = #tpu.dot_dimension_numbers<[1], [0], [0], [1], [0, 0, 1, 1], [], []>} : vector<8x32xbf16>, vector<32x32xbf16>, vector<8x32xf32> -> vector<8x32xf32>
    %134 = vector.broadcast %20 : vector<1x32xf32> to vector<8x32xf32>
    %135 = arith.addf %133, %134 : vector<8x32xf32>
    %136 = arith.addf %131, %135 : vector<8x32xf32>
    %137 = vector.extract_strided_slice %22 {offsets = [1, 0], sizes = [1, 32], strides = [1, 1]} : vector<2x32xf32> to vector<1x32xf32>
    %138 = vector.extract_strided_slice %24 {offsets = [1, 0], sizes = [1, 32], strides = [1, 1]} : vector<2x32xf32> to vector<1x32xf32>
    %cst_55 = arith.constant dense<0.000000e+00> : vector<8xf32>
    %139 = vector.multi_reduction <add>, %136, %cst_55 [1] : vector<8x32xf32> to vector<8xf32>
    %140 = vector.shape_cast %139 : vector<8xf32> to vector<8x1xf32>
    %cst_56 = arith.constant 3.200000e+01 : f32
    %141 = vector.broadcast %cst_56 : f32 to vector<8x1xf32>
    %142 = arith.divf %140, %141 : vector<8x1xf32>
    %143 = vector.broadcast %142 : vector<8x1xf32> to vector<8x32xf32>
    %144 = arith.subf %136, %143 : vector<8x32xf32>
    %145 = arith.mulf %144, %144 : vector<8x32xf32>
    %cst_57 = arith.constant dense<0.000000e+00> : vector<8xf32>
    %146 = vector.multi_reduction <add>, %145, %cst_57 [1] : vector<8x32xf32> to vector<8xf32>
    %147 = vector.shape_cast %146 : vector<8xf32> to vector<8x1xf32>
    %cst_58 = arith.constant 3.200000e+01 : f32
    %148 = vector.broadcast %cst_58 : f32 to vector<8x1xf32>
    %149 = arith.divf %147, %148 : vector<8x1xf32>
    %150 = vector.broadcast %142 : vector<8x1xf32> to vector<8x32xf32>
    %151 = arith.subf %136, %150 : vector<8x32xf32>
    %cst_59 = arith.constant 9.99999974E-6 : f32
    %152 = vector.broadcast %cst_59 : f32 to vector<8x1xf32>
    %153 = arith.addf %149, %152 : vector<8x1xf32>
    %154 = math.rsqrt %153 : vector<8x1xf32>
    %155 = vector.broadcast %154 : vector<8x1xf32> to vector<8x32xf32>
    %156 = arith.mulf %151, %155 : vector<8x32xf32>
    %157 = vector.broadcast %137 : vector<1x32xf32> to vector<8x32xf32>
    %158 = arith.mulf %156, %157 : vector<8x32xf32>
    %159 = vector.broadcast %138 : vector<1x32xf32> to vector<8x32xf32>
    %160 = arith.addf %158, %159 : vector<8x32xf32>
    %c1 = arith.constant 1 : index
    %c0_60 = arith.constant 0 : index
    %c0_61 = arith.constant 0 : index
    %161 = vector.load %arg3[%c1, %c0_60, %c0_61] : memref<2x32x96xbf16, #tpu.memory_space<vmem>>, vector<1x32x96xbf16>
    %162 = vector.shape_cast %161 : vector<1x32x96xbf16> to vector<32x96xbf16>
    %c1_62 = arith.constant 1 : index
    %c0_63 = arith.constant 0 : index
    %c0_64 = arith.constant 0 : index
    %163 = vector.load %arg4[%c1_62, %c0_63, %c0_64] : memref<2x1x96xf32, #tpu.memory_space<vmem>>, vector<1x1x96xf32>
    %164 = vector.shape_cast %163 : vector<1x1x96xf32> to vector<1x96xf32>
    %c1_65 = arith.constant 1 : index
    %c0_66 = arith.constant 0 : index
    %c0_67 = arith.constant 0 : index
    %165 = vector.load %arg5[%c1_65, %c0_66, %c0_67] : memref<2x32x32xbf16, #tpu.memory_space<vmem>>, vector<1x32x32xbf16>
    %166 = vector.shape_cast %165 : vector<1x32x32xbf16> to vector<32x32xbf16>
    %c1_68 = arith.constant 1 : index
    %c0_69 = arith.constant 0 : index
    %c0_70 = arith.constant 0 : index
    %167 = vector.load %arg6[%c1_68, %c0_69, %c0_70] : memref<2x1x32xf32, #tpu.memory_space<vmem>>, vector<1x1x32xf32>
    %168 = vector.shape_cast %167 : vector<1x1x32xf32> to vector<1x32xf32>
    %c1_71 = arith.constant 1 : index
    %c0_72 = arith.constant 0 : index
    %c0_73 = arith.constant 0 : index
    %169 = vector.load %arg7[%c1_71, %c0_72, %c0_73] : memref<2x32x32xbf16, #tpu.memory_space<vmem>>, vector<1x32x32xbf16>
    %170 = vector.shape_cast %169 : vector<1x32x32xbf16> to vector<32x32xbf16>
    %c1_74 = arith.constant 1 : index
    %c0_75 = arith.constant 0 : index
    %c0_76 = arith.constant 0 : index
    %171 = vector.load %arg8[%c1_74, %c0_75, %c0_76] : memref<2x1x32xf32, #tpu.memory_space<vmem>>, vector<1x1x32xf32>
    %172 = vector.shape_cast %171 : vector<1x1x32xf32> to vector<1x32xf32>
    %c1_77 = arith.constant 1 : index
    %c0_78 = arith.constant 0 : index
    %c0_79 = arith.constant 0 : index
    %173 = vector.load %arg9[%c1_77, %c0_78, %c0_79] : memref<2x2x32xf32, #tpu.memory_space<vmem>>, vector<1x2x32xf32>
    %174 = vector.shape_cast %173 : vector<1x2x32xf32> to vector<2x32xf32>
    %c1_80 = arith.constant 1 : index
    %c0_81 = arith.constant 0 : index
    %c0_82 = arith.constant 0 : index
    %175 = vector.load %arg10[%c1_80, %c0_81, %c0_82] : memref<2x2x32xf32, #tpu.memory_space<vmem>>, vector<1x2x32xf32>
    %176 = vector.shape_cast %175 : vector<1x2x32xf32> to vector<2x32xf32>
    %177 = arith.truncf %160 : vector<8x32xf32> to vector<8x32xbf16>
    %cst_83 = arith.constant dense<0.000000e+00> : vector<8x96xf32>
    %178 = tpu.matmul %177, %162, %cst_83 {dimension_numbers = #tpu.dot_dimension_numbers<[1], [0], [0], [1], [0, 0, 1, 1], [], []>} : vector<8x32xbf16>, vector<32x96xbf16>, vector<8x96xf32> -> vector<8x96xf32>
    %179 = vector.broadcast %164 : vector<1x96xf32> to vector<8x96xf32>
    %180 = arith.addf %178, %179 : vector<8x96xf32>
    %181 = vector.extract_strided_slice %180 {offsets = [0, 0], sizes = [8, 32], strides = [1, 1]} : vector<8x96xf32> to vector<8x32xf32>
    %cst_84 = arith.constant 0.353553385 : f32
    %182 = vector.broadcast %cst_84 : f32 to vector<8x32xf32>
    %183 = arith.mulf %181, %182 : vector<8x32xf32>
    %184 = vector.extract_strided_slice %180 {offsets = [0, 32], sizes = [8, 32], strides = [1, 1]} : vector<8x96xf32> to vector<8x32xf32>
    %185 = vector.extract_strided_slice %180 {offsets = [0, 64], sizes = [8, 32], strides = [1, 1]} : vector<8x96xf32> to vector<8x32xf32>
    %186 = vector.extract_strided_slice %183 {offsets = [0, 0], sizes = [8, 8], strides = [1, 1]} : vector<8x32xf32> to vector<8x8xf32>
    %187 = vector.extract_strided_slice %184 {offsets = [0, 0], sizes = [8, 8], strides = [1, 1]} : vector<8x32xf32> to vector<8x8xf32>
    %188 = vector.extract_strided_slice %185 {offsets = [0, 0], sizes = [8, 8], strides = [1, 1]} : vector<8x32xf32> to vector<8x8xf32>
    %cst_85 = arith.constant dense<0.000000e+00> : vector<8x8xf32>
    %189 = tpu.matmul %186, %187, %cst_85 {dimension_numbers = #tpu.dot_dimension_numbers<[1], [1], [0], [0], [0, 0, 1, 0], [], []>} : vector<8x8xf32>, vector<8x8xf32>, vector<8x8xf32> -> vector<8x8xf32>
    %190 = vector.broadcast %8 : vector<1x8xf32> to vector<8x8xf32>
    %191 = arith.addf %189, %190 : vector<8x8xf32>
    %cst_86 = arith.constant dense<0xFF800000> : vector<8xf32>
    %192 = vector.multi_reduction <maximumf>, %191, %cst_86 [1] : vector<8x8xf32> to vector<8xf32>
    %193 = vector.shape_cast %192 : vector<8xf32> to vector<8x1xf32>
    %194 = vector.broadcast %193 : vector<8x1xf32> to vector<8x8xf32>
    %195 = arith.subf %191, %194 : vector<8x8xf32>
    %196 = math.exp %195 : vector<8x8xf32>
    %cst_87 = arith.constant dense<0.000000e+00> : vector<8xf32>
    %197 = vector.multi_reduction <add>, %196, %cst_87 [1] : vector<8x8xf32> to vector<8xf32>
    %198 = vector.shape_cast %197 : vector<8xf32> to vector<8x1xf32>
    %199 = tpu.reciprocal %198 {approx = true} : vector<8x1xf32> -> vector<8x1xf32>
    %200 = vector.broadcast %199 : vector<8x1xf32> to vector<8x8xf32>
    %201 = arith.mulf %196, %200 : vector<8x8xf32>
    %cst_88 = arith.constant dense<0.000000e+00> : vector<8x8xf32>
    %202 = tpu.matmul %201, %188, %cst_88 {dimension_numbers = #tpu.dot_dimension_numbers<[1], [0], [0], [1], [0, 0, 1, 1], [], []>} : vector<8x8xf32>, vector<8x8xf32>, vector<8x8xf32> -> vector<8x8xf32>
    %203 = vector.extract_strided_slice %183 {offsets = [0, 8], sizes = [8, 8], strides = [1, 1]} : vector<8x32xf32> to vector<8x8xf32>
    %204 = vector.extract_strided_slice %184 {offsets = [0, 8], sizes = [8, 8], strides = [1, 1]} : vector<8x32xf32> to vector<8x8xf32>
    %205 = vector.extract_strided_slice %185 {offsets = [0, 8], sizes = [8, 8], strides = [1, 1]} : vector<8x32xf32> to vector<8x8xf32>
    %cst_89 = arith.constant dense<0.000000e+00> : vector<8x8xf32>
    %206 = tpu.matmul %203, %204, %cst_89 {dimension_numbers = #tpu.dot_dimension_numbers<[1], [1], [0], [0], [0, 0, 1, 0], [], []>} : vector<8x8xf32>, vector<8x8xf32>, vector<8x8xf32> -> vector<8x8xf32>
    %207 = vector.broadcast %8 : vector<1x8xf32> to vector<8x8xf32>
    %208 = arith.addf %206, %207 : vector<8x8xf32>
    %cst_90 = arith.constant dense<0xFF800000> : vector<8xf32>
    %209 = vector.multi_reduction <maximumf>, %208, %cst_90 [1] : vector<8x8xf32> to vector<8xf32>
    %210 = vector.shape_cast %209 : vector<8xf32> to vector<8x1xf32>
    %211 = vector.broadcast %210 : vector<8x1xf32> to vector<8x8xf32>
    %212 = arith.subf %208, %211 : vector<8x8xf32>
    %213 = math.exp %212 : vector<8x8xf32>
    %cst_91 = arith.constant dense<0.000000e+00> : vector<8xf32>
    %214 = vector.multi_reduction <add>, %213, %cst_91 [1] : vector<8x8xf32> to vector<8xf32>
    %215 = vector.shape_cast %214 : vector<8xf32> to vector<8x1xf32>
    %216 = tpu.reciprocal %215 {approx = true} : vector<8x1xf32> -> vector<8x1xf32>
    %217 = vector.broadcast %216 : vector<8x1xf32> to vector<8x8xf32>
    %218 = arith.mulf %213, %217 : vector<8x8xf32>
    %cst_92 = arith.constant dense<0.000000e+00> : vector<8x8xf32>
    %219 = tpu.matmul %218, %205, %cst_92 {dimension_numbers = #tpu.dot_dimension_numbers<[1], [0], [0], [1], [0, 0, 1, 1], [], []>} : vector<8x8xf32>, vector<8x8xf32>, vector<8x8xf32> -> vector<8x8xf32>
    %220 = vector.extract_strided_slice %183 {offsets = [0, 16], sizes = [8, 8], strides = [1, 1]} : vector<8x32xf32> to vector<8x8xf32>
    %221 = vector.extract_strided_slice %184 {offsets = [0, 16], sizes = [8, 8], strides = [1, 1]} : vector<8x32xf32> to vector<8x8xf32>
    %222 = vector.extract_strided_slice %185 {offsets = [0, 16], sizes = [8, 8], strides = [1, 1]} : vector<8x32xf32> to vector<8x8xf32>
    %cst_93 = arith.constant dense<0.000000e+00> : vector<8x8xf32>
    %223 = tpu.matmul %220, %221, %cst_93 {dimension_numbers = #tpu.dot_dimension_numbers<[1], [1], [0], [0], [0, 0, 1, 0], [], []>} : vector<8x8xf32>, vector<8x8xf32>, vector<8x8xf32> -> vector<8x8xf32>
    %224 = vector.broadcast %8 : vector<1x8xf32> to vector<8x8xf32>
    %225 = arith.addf %223, %224 : vector<8x8xf32>
    %cst_94 = arith.constant dense<0xFF800000> : vector<8xf32>
    %226 = vector.multi_reduction <maximumf>, %225, %cst_94 [1] : vector<8x8xf32> to vector<8xf32>
    %227 = vector.shape_cast %226 : vector<8xf32> to vector<8x1xf32>
    %228 = vector.broadcast %227 : vector<8x1xf32> to vector<8x8xf32>
    %229 = arith.subf %225, %228 : vector<8x8xf32>
    %230 = math.exp %229 : vector<8x8xf32>
    %cst_95 = arith.constant dense<0.000000e+00> : vector<8xf32>
    %231 = vector.multi_reduction <add>, %230, %cst_95 [1] : vector<8x8xf32> to vector<8xf32>
    %232 = vector.shape_cast %231 : vector<8xf32> to vector<8x1xf32>
    %233 = tpu.reciprocal %232 {approx = true} : vector<8x1xf32> -> vector<8x1xf32>
    %234 = vector.broadcast %233 : vector<8x1xf32> to vector<8x8xf32>
    %235 = arith.mulf %230, %234 : vector<8x8xf32>
    %cst_96 = arith.constant dense<0.000000e+00> : vector<8x8xf32>
    %236 = tpu.matmul %235, %222, %cst_96 {dimension_numbers = #tpu.dot_dimension_numbers<[1], [0], [0], [1], [0, 0, 1, 1], [], []>} : vector<8x8xf32>, vector<8x8xf32>, vector<8x8xf32> -> vector<8x8xf32>
    %237 = vector.extract_strided_slice %183 {offsets = [0, 24], sizes = [8, 8], strides = [1, 1]} : vector<8x32xf32> to vector<8x8xf32>
    %238 = vector.extract_strided_slice %184 {offsets = [0, 24], sizes = [8, 8], strides = [1, 1]} : vector<8x32xf32> to vector<8x8xf32>
    %239 = vector.extract_strided_slice %185 {offsets = [0, 24], sizes = [8, 8], strides = [1, 1]} : vector<8x32xf32> to vector<8x8xf32>
    %cst_97 = arith.constant dense<0.000000e+00> : vector<8x8xf32>
    %240 = tpu.matmul %237, %238, %cst_97 {dimension_numbers = #tpu.dot_dimension_numbers<[1], [1], [0], [0], [0, 0, 1, 0], [], []>} : vector<8x8xf32>, vector<8x8xf32>, vector<8x8xf32> -> vector<8x8xf32>
    %241 = vector.broadcast %8 : vector<1x8xf32> to vector<8x8xf32>
    %242 = arith.addf %240, %241 : vector<8x8xf32>
    %cst_98 = arith.constant dense<0xFF800000> : vector<8xf32>
    %243 = vector.multi_reduction <maximumf>, %242, %cst_98 [1] : vector<8x8xf32> to vector<8xf32>
    %244 = vector.shape_cast %243 : vector<8xf32> to vector<8x1xf32>
    %245 = vector.broadcast %244 : vector<8x1xf32> to vector<8x8xf32>
    %246 = arith.subf %242, %245 : vector<8x8xf32>
    %247 = math.exp %246 : vector<8x8xf32>
    %cst_99 = arith.constant dense<0.000000e+00> : vector<8xf32>
    %248 = vector.multi_reduction <add>, %247, %cst_99 [1] : vector<8x8xf32> to vector<8xf32>
    %249 = vector.shape_cast %248 : vector<8xf32> to vector<8x1xf32>
    %250 = tpu.reciprocal %249 {approx = true} : vector<8x1xf32> -> vector<8x1xf32>
    %251 = vector.broadcast %250 : vector<8x1xf32> to vector<8x8xf32>
    %252 = arith.mulf %247, %251 : vector<8x8xf32>
    %cst_100 = arith.constant dense<0.000000e+00> : vector<8x8xf32>
    %253 = tpu.matmul %252, %239, %cst_100 {dimension_numbers = #tpu.dot_dimension_numbers<[1], [0], [0], [1], [0, 0, 1, 1], [], []>} : vector<8x8xf32>, vector<8x8xf32>, vector<8x8xf32> -> vector<8x8xf32>
    %254 = tpu.concatenate %202, %219, %236, %253 in 1 : vector<8x8xf32>, vector<8x8xf32>, vector<8x8xf32>, vector<8x8xf32> -> vector<8x32xf32>
    %255 = arith.truncf %254 : vector<8x32xf32> to vector<8x32xbf16>
    %cst_101 = arith.constant dense<0.000000e+00> : vector<8x32xf32>
    %256 = tpu.matmul %255, %166, %cst_101 {dimension_numbers = #tpu.dot_dimension_numbers<[1], [0], [0], [1], [0, 0, 1, 1], [], []>} : vector<8x32xbf16>, vector<32x32xbf16>, vector<8x32xf32> -> vector<8x32xf32>
    %257 = vector.broadcast %168 : vector<1x32xf32> to vector<8x32xf32>
    %258 = arith.addf %256, %257 : vector<8x32xf32>
    %259 = arith.addf %160, %258 : vector<8x32xf32>
    %260 = vector.extract_strided_slice %174 {offsets = [0, 0], sizes = [1, 32], strides = [1, 1]} : vector<2x32xf32> to vector<1x32xf32>
    %261 = vector.extract_strided_slice %176 {offsets = [0, 0], sizes = [1, 32], strides = [1, 1]} : vector<2x32xf32> to vector<1x32xf32>
    %cst_102 = arith.constant dense<0.000000e+00> : vector<8xf32>
    %262 = vector.multi_reduction <add>, %259, %cst_102 [1] : vector<8x32xf32> to vector<8xf32>
    %263 = vector.shape_cast %262 : vector<8xf32> to vector<8x1xf32>
    %cst_103 = arith.constant 3.200000e+01 : f32
    %264 = vector.broadcast %cst_103 : f32 to vector<8x1xf32>
    %265 = arith.divf %263, %264 : vector<8x1xf32>
    %266 = vector.broadcast %265 : vector<8x1xf32> to vector<8x32xf32>
    %267 = arith.subf %259, %266 : vector<8x32xf32>
    %268 = arith.mulf %267, %267 : vector<8x32xf32>
    %cst_104 = arith.constant dense<0.000000e+00> : vector<8xf32>
    %269 = vector.multi_reduction <add>, %268, %cst_104 [1] : vector<8x32xf32> to vector<8xf32>
    %270 = vector.shape_cast %269 : vector<8xf32> to vector<8x1xf32>
    %cst_105 = arith.constant 3.200000e+01 : f32
    %271 = vector.broadcast %cst_105 : f32 to vector<8x1xf32>
    %272 = arith.divf %270, %271 : vector<8x1xf32>
    %273 = vector.broadcast %265 : vector<8x1xf32> to vector<8x32xf32>
    %274 = arith.subf %259, %273 : vector<8x32xf32>
    %cst_106 = arith.constant 9.99999974E-6 : f32
    %275 = vector.broadcast %cst_106 : f32 to vector<8x1xf32>
    %276 = arith.addf %272, %275 : vector<8x1xf32>
    %277 = math.rsqrt %276 : vector<8x1xf32>
    %278 = vector.broadcast %277 : vector<8x1xf32> to vector<8x32xf32>
    %279 = arith.mulf %274, %278 : vector<8x32xf32>
    %280 = vector.broadcast %260 : vector<1x32xf32> to vector<8x32xf32>
    %281 = arith.mulf %279, %280 : vector<8x32xf32>
    %282 = vector.broadcast %261 : vector<1x32xf32> to vector<8x32xf32>
    %283 = arith.addf %281, %282 : vector<8x32xf32>
    %284 = arith.truncf %283 : vector<8x32xf32> to vector<8x32xbf16>
    %cst_107 = arith.constant dense<0.000000e+00> : vector<8x32xf32>
    %285 = tpu.matmul %284, %170, %cst_107 {dimension_numbers = #tpu.dot_dimension_numbers<[1], [0], [0], [1], [0, 0, 1, 1], [], []>} : vector<8x32xbf16>, vector<32x32xbf16>, vector<8x32xf32> -> vector<8x32xf32>
    %286 = vector.broadcast %172 : vector<1x32xf32> to vector<8x32xf32>
    %287 = arith.addf %285, %286 : vector<8x32xf32>
    %288 = arith.addf %283, %287 : vector<8x32xf32>
    %289 = vector.extract_strided_slice %174 {offsets = [1, 0], sizes = [1, 32], strides = [1, 1]} : vector<2x32xf32> to vector<1x32xf32>
    %290 = vector.extract_strided_slice %176 {offsets = [1, 0], sizes = [1, 32], strides = [1, 1]} : vector<2x32xf32> to vector<1x32xf32>
    %cst_108 = arith.constant dense<0.000000e+00> : vector<8xf32>
    %291 = vector.multi_reduction <add>, %288, %cst_108 [1] : vector<8x32xf32> to vector<8xf32>
    %292 = vector.shape_cast %291 : vector<8xf32> to vector<8x1xf32>
    %cst_109 = arith.constant 3.200000e+01 : f32
    %293 = vector.broadcast %cst_109 : f32 to vector<8x1xf32>
    %294 = arith.divf %292, %293 : vector<8x1xf32>
    %295 = vector.broadcast %294 : vector<8x1xf32> to vector<8x32xf32>
    %296 = arith.subf %288, %295 : vector<8x32xf32>
    %297 = arith.mulf %296, %296 : vector<8x32xf32>
    %cst_110 = arith.constant dense<0.000000e+00> : vector<8xf32>
    %298 = vector.multi_reduction <add>, %297, %cst_110 [1] : vector<8x32xf32> to vector<8xf32>
    %299 = vector.shape_cast %298 : vector<8xf32> to vector<8x1xf32>
    %cst_111 = arith.constant 3.200000e+01 : f32
    %300 = vector.broadcast %cst_111 : f32 to vector<8x1xf32>
    %301 = arith.divf %299, %300 : vector<8x1xf32>
    %302 = vector.broadcast %294 : vector<8x1xf32> to vector<8x32xf32>
    %303 = arith.subf %288, %302 : vector<8x32xf32>
    %cst_112 = arith.constant 9.99999974E-6 : f32
    %304 = vector.broadcast %cst_112 : f32 to vector<8x1xf32>
    %305 = arith.addf %301, %304 : vector<8x1xf32>
    %306 = math.rsqrt %305 : vector<8x1xf32>
    %307 = vector.broadcast %306 : vector<8x1xf32> to vector<8x32xf32>
    %308 = arith.mulf %303, %307 : vector<8x32xf32>
    %309 = vector.broadcast %289 : vector<1x32xf32> to vector<8x32xf32>
    %310 = arith.mulf %308, %309 : vector<8x32xf32>
    %311 = vector.broadcast %290 : vector<1x32xf32> to vector<8x32xf32>
    %312 = arith.addf %310, %311 : vector<8x32xf32>
    %c0_113 = arith.constant 0 : index
    %c0_114 = arith.constant 0 : index
    %c0_115 = arith.constant 0 : index
    %313 = vector.load %arg11[%c0_113, %c0_114, %c0_115] : memref<1x8x32xf32, #tpu.memory_space<vmem>>, vector<1x8x32xf32>
    %314 = vector.shape_cast %313 : vector<1x8x32xf32> to vector<8x32xf32>
    %315 = vector.shape_cast %312 : vector<8x32xf32> to vector<1x8x32xf32>
    tpu.vector_store %arg11[%c0_113, %c0_114, %c0_115], %315 {strides = array<i32>} : memref<1x8x32xf32, #tpu.memory_space<vmem>>, vector<1x8x32xf32>,
    return
  }
  func.func @transform_0(%arg0: i32) -> (i32, i32, i32) {
    %c0_i32 = arith.constant 0 : i32
    %c0_i32_0 = arith.constant 0 : i32
    %c0_i32_1 = arith.constant 0 : i32
    return %arg0, %c0_i32, %c0_i32_0 : i32, i32, i32
  }
  func.func @transform_1(%arg0: i32) -> (i32, i32, i32) {
    %c0_i32 = arith.constant 0 : i32
    %c0_i32_0 = arith.constant 0 : i32
    %c0_i32_1 = arith.constant 0 : i32
    return %arg0, %c0_i32, %c0_i32_0 : i32, i32, i32
  }
  func.func @transform_2(%arg0: i32) -> (i32, i32, i32) {
    %c0_i32 = arith.constant 0 : i32
    %c0_i32_0 = arith.constant 0 : i32
    %c0_i32_1 = arith.constant 0 : i32
    %c0_i32_2 = arith.constant 0 : i32
    return %c0_i32, %c0_i32_0, %c0_i32_1 : i32, i32, i32
  }
  func.func @transform_3(%arg0: i32) -> (i32, i32, i32) {
    %c0_i32 = arith.constant 0 : i32
    %c0_i32_0 = arith.constant 0 : i32
    %c0_i32_1 = arith.constant 0 : i32
    %c0_i32_2 = arith.constant 0 : i32
    return %c0_i32, %c0_i32_0, %c0_i32_1 : i32, i32, i32
  }
  func.func @transform_4(%arg0: i32) -> (i32, i32, i32) {
    %c0_i32 = arith.constant 0 : i32
    %c0_i32_0 = arith.constant 0 : i32
    %c0_i32_1 = arith.constant 0 : i32
    %c0_i32_2 = arith.constant 0 : i32
    return %c0_i32, %c0_i32_0, %c0_i32_1 : i32, i32, i32
  }
  func.func @transform_5(%arg0: i32) -> (i32, i32, i32) {
    %c0_i32 = arith.constant 0 : i32
    %c0_i32_0 = arith.constant 0 : i32
    %c0_i32_1 = arith.constant 0 : i32
    %c0_i32_2 = arith.constant 0 : i32
    return %c0_i32, %c0_i32_0, %c0_i32_1 : i32, i32, i32
  }
  func.func @transform_6(%arg0: i32) -> (i32, i32, i32) {
    %c0_i32 = arith.constant 0 : i32
    %c0_i32_0 = arith.constant 0 : i32
    %c0_i32_1 = arith.constant 0 : i32
    %c0_i32_2 = arith.constant 0 : i32
    return %c0_i32, %c0_i32_0, %c0_i32_1 : i32, i32, i32
  }
  func.func @transform_7(%arg0: i32) -> (i32, i32, i32) {
    %c0_i32 = arith.constant 0 : i32
    %c0_i32_0 = arith.constant 0 : i32
    %c0_i32_1 = arith.constant 0 : i32
    %c0_i32_2 = arith.constant 0 : i32
    return %c0_i32, %c0_i32_0, %c0_i32_1 : i32, i32, i32
  }
  func.func @transform_8(%arg0: i32) -> (i32, i32, i32) {
    %c0_i32 = arith.constant 0 : i32
    %c0_i32_0 = arith.constant 0 : i32
    %c0_i32_1 = arith.constant 0 : i32
    %c0_i32_2 = arith.constant 0 : i32
    return %c0_i32, %c0_i32_0, %c0_i32_1 : i32, i32, i32
  }
  func.func @transform_9(%arg0: i32) -> (i32, i32, i32) {
    %c0_i32 = arith.constant 0 : i32
    %c0_i32_0 = arith.constant 0 : i32
    %c0_i32_1 = arith.constant 0 : i32
    %c0_i32_2 = arith.constant 0 : i32
    return %c0_i32, %c0_i32_0, %c0_i32_1 : i32, i32, i32
  }
  func.func @transform_10(%arg0: i32) -> (i32, i32, i32) {
    %c0_i32 = arith.constant 0 : i32
    %c0_i32_0 = arith.constant 0 : i32
    %c0_i32_1 = arith.constant 0 : i32
    return %arg0, %c0_i32, %c0_i32_0 : i32, i32, i32
  }
}

</mosaic_0001>

<llo_original>
// kernel: tpu_custom_call.1
$region0: #{tpu_custom_call.1}
  #allocation0 [shape = 'u32[]', space=smem, size = 0x4, offset = 0x4, fixed_abs, tag = 'smem constant byte address 0x4 - core index']
  #allocation1 [shape = 'u32[72,128]{1,0:T(1,128)}', space=vmem, size = 0x9000, scoped, tag = 'internal scratch']
  %s0 = inlined_call_operand.hbm [shape: s32[2,1,8], index: 0, kind: input, shape index: {}]
  %s1 = inlined_call_operand.hbm [shape: f32[2,8,32], index: 1, kind: input, shape index: {}]
  %s2 = inlined_call_operand.hbm [shape: bf16[2,32,96], index: 2, kind: input, shape index: {}]
  %s3 = inlined_call_operand.hbm [shape: f32[2,1,96], index: 3, kind: input, shape index: {}]
  %s4 = inlined_call_operand.hbm [shape: bf16[2,32,32], index: 4, kind: input, shape index: {}]
  %s5 = inlined_call_operand.hbm [shape: f32[2,1,32], index: 5, kind: input, shape index: {}]
  %s6 = inlined_call_operand.hbm [shape: bf16[2,32,32], index: 6, kind: input, shape index: {}]
  %s7 = inlined_call_operand.hbm [shape: f32[2,1,32], index: 7, kind: input, shape index: {}]
  %s8 = inlined_call_operand.vmem [shape: f32[2,2,32], index: 8, kind: input, shape index: {}]
  %s9 = inlined_call_operand.vmem [shape: f32[2,2,32], index: 9, kind: input, shape index: {}]
  %s10 = inlined_call_operand.hbm [shape: f32[2,8,32], index: 10, kind: output, shape index: {}]
  %s11 = sld [smem:[#allocation0]]
  $region105: #{tpu_custom_call.1} parent=0
    _
  %s13 = ssub.s32 1, %s11
  %s14 = scalar_select 0, %s13, %s11
  $region1: #{tpu_custom_call.1} parent=0
    #allocation2 [shape = 'u8[1024]{0}', space=vmem, size = 0x400, scoped, tag = 'input window, operand 0']
    #allocation3 [shape = 's32[2]{0}', space=sflag, size = 0x8, scoped, tag = 'scoped memory for tpu_custom_call.1']
    #allocation4 [shape = 's32[2]{0}', space=sflag, size = 0x8, scoped, tag = 'scoped memory for tpu_custom_call.1']
    #allocation5 [shape = 'u8[8192]{0}', space=vmem, size = 0x2000, scoped, tag = 'input window, operand 1']
    #allocation6 [shape = 's32[2]{0}', space=sflag, size = 0x8, scoped, tag = 'scoped memory for tpu_custom_call.1']
    #allocation7 [shape = 'u8[16384]{0}', space=vmem, size = 0x4000, scoped, tag = 'input window, operand 2, single buffered']
    #allocation8 [shape = 'u8[1024]{0}', space=vmem, size = 0x400, scoped, tag = 'input window, operand 3, single buffered']
    #allocation9 [shape = 's32[1]{0}', space=sflag, size = 0x4, scoped, tag = 'scoped memory for tpu_custom_call.1']
    #allocation10 [shape = 'u8[16384]{0}', space=vmem, size = 0x4000, scoped, tag = 'input window, operand 4, single buffered']
    #allocation11 [shape = 'u8[1024]{0}', space=vmem, size = 0x400, scoped, tag = 'input window, operand 5, single buffered']
    #allocation12 [shape = 's32[1]{0}', space=sflag, size = 0x4, scoped, tag = 'scoped memory for tpu_custom_call.1']
    #allocation13 [shape = 'u8[16384]{0}', space=vmem, size = 0x4000, scoped, tag = 'input window, operand 6, single buffered']
    #allocation14 [shape = 'u8[1024]{0}', space=vmem, size = 0x400, scoped, tag = 'input window, operand 7, single buffered']
    #allocation15 [shape = 's32[1]{0}', space=sflag, size = 0x4, scoped, tag = 'scoped memory for tpu_custom_call.1']
    #allocation16 [shape = 'u8[8192]{0}', space=vmem, size = 0x2000, scoped, tag = 'output window, operand 0']
    %15 = vsyncpa [#allocation3], 0
    %s16 = scalar_lea.sflag [#allocation3], 1
    %17 = vsyncpa %s16, 0
    %18 = vsyncpa [#allocation6], 0
    %s19 = scalar_lea.sflag [#allocation6], 1
    %20 = vsyncpa %s19, 0
    %21 = vsyncpa [#allocation9], 0
    %22 = vsyncpa [#allocation12], 0
    %23 = vsyncpa [#allocation15], 0
    %24 = vsyncpa [#allocation4], 0
    %s25 = scalar_lea.sflag [#allocation4], 1
    %26 = vsyncpa %s25, 0
    loop: start=0, step=1, limit=4
    $region2: #{tpu_custom_call.1} parent=1 // loop_pre_header
      _
    $region3: #{tpu_custom_call.1} parent=1 // loop_header
      %s28 = sphi 0, %s32
      %p29 = scmp.ge.s32.totalorder %s28, 4
      %s38 = sphi 0, %s40
      %s41 = sphi 0, %s38
      %s42 = sphi 0, %s41
      %s58 = sphi 0, %s42
      %s64 = sphi 0, %s66
      %s67 = sphi 0, %s64
      %s68 = sphi 0, %s67
      %s84 = sphi 0, %s68
      %s88 = sphi 0, %s88
      %s90 = sphi 0, %s88
      %s91 = sphi 0, %s90
      %s105 = sphi 0, %s91
      %s109 = sphi 0, %s109
      %s111 = sphi 0, %s109
      %s112 = sphi 0, %s111
      %s126 = sphi 0, %s112
      %s130 = sphi 0, %s130
      %s132 = sphi 0, %s130
      %s133 = sphi 0, %s132
      %s147 = sphi 0, %s133
      %s151 = sphi 0, %s151
      %s153 = sphi 0, %s151
      %s154 = sphi 0, %s153
      %s168 = sphi 0, %s154
      %s172 = sphi 0, %s172
      %s174 = sphi 0, %s172
      %s175 = sphi 0, %s174
      %s189 = sphi 0, %s175
      %s193 = sphi 0, %s193
      %s195 = sphi 0, %s193
      %s196 = sphi 0, %s195
      %s210 = sphi 0, %s196
      %s214 = sphi 0, %s214
      %s216 = sphi 0, %s214
      %s217 = sphi 0, %s216
      %s231 = sphi 0, %s217
      %s235 = sphi 0, %s235
      %s237 = sphi 0, %s235
      %s238 = sphi 0, %s237
      %s252 = sphi 0, %s238
      %s258 = sphi 0, %s260
      %s261 = sphi 0, %s258
      %s262 = sphi 0, %s261
      %s278 = sphi 0, %s262
    $region4: #{tpu_custom_call.1} parent=1 // loop_header_branch
      %31 = sbr.rel (%p29) target = $region8
    $region5: #{tpu_custom_call.1} parent=1 // loop_body
      %s33 = ssub.s32 %s28, 1
      %s34 = ssub.s32 %s28, 2
      %s35 = sadd.s32 %s28, 1
      %s36 = ssub.s32 %s28, %s35
      %p37 = scmp.eq.s32.totalorder %s36, 0
      %s39 = sadd.s32 %s38, 1
      %s40 = scalar_select %p37, %s38, %s39
      %p43 = pneg %p37
      %p44 = scmp.eq.s32.totalorder %s28, 1
      %p45 = por %p43, %p44
      %p46 = scmp.ne.s32.totalorder %s38, %s41
      %p47 = scmp.eq.s32.totalorder %s28, 0
      %p48 = por %p46, %p47
      %p49 = scmp.ne.s32.totalorder %s38, %s41
      %p50 = scmp.eq.s32.totalorder %s33, 1
      %p51 = por %p49, %p50
      %p52 = scmp.ne.s32.totalorder %s41, %s42
      %p53 = scmp.eq.s32.totalorder %s33, 0
      %p54 = por %p52, %p53
      %p55 = scmp.ne.s32.totalorder %s41, %s42
      %p56 = scmp.eq.s32.totalorder %s34, 1
      %p57 = por %p55, %p56
      %p59 = scmp.ne.s32.totalorder %s42, %s58
      %p60 = scmp.eq.s32.totalorder %s34, 0
      %p61 = por %p59, %p60
      %s62 = ssub.s32 %s28, %s35
      %p63 = scmp.eq.s32.totalorder %s62, 0
      %s65 = sadd.s32 %s64, 1
      %s66 = scalar_select %p63, %s64, %s65
      %p69 = pneg %p63
      %p70 = scmp.eq.s32.totalorder %s28, 1
      %p71 = por %p69, %p70
      %p72 = scmp.ne.s32.totalorder %s64, %s67
      %p73 = scmp.eq.s32.totalorder %s28, 0
      %p74 = por %p72, %p73
      %p75 = scmp.ne.s32.totalorder %s64, %s67
      %p76 = scmp.eq.s32.totalorder %s33, 1
      %p77 = por %p75, %p76
      %p78 = scmp.ne.s32.totalorder %s67, %s68
      %p79 = scmp.eq.s32.totalorder %s33, 0
      %p80 = por %p78, %p79
      %p81 = scmp.ne.s32.totalorder %s67, %s68
      %p82 = scmp.eq.s32.totalorder %s34, 1
      %p83 = por %p81, %p82
      %p85 = scmp.ne.s32.totalorder %s68, %s84
      %p86 = scmp.eq.s32.totalorder %s34, 0
      %p87 = por %p85, %p86
      %s89 = sadd.s32 %s88, 1
      %p92 = scmp.eq.s32.totalorder %s28, 1
      %p93 = scmp.ne.s32.totalorder %s88, %s90
      %p94 = scmp.eq.s32.totalorder %s28, 0
      %p95 = por %p93, %p94
      %p96 = scmp.ne.s32.totalorder %s88, %s90
      %p97 = scmp.eq.s32.totalorder %s33, 1
      %p98 = por %p96, %p97
      %p99 = scmp.ne.s32.totalorder %s90, %s91
      %p100 = scmp.eq.s32.totalorder %s33, 0
      %p101 = por %p99, %p100
      %p102 = scmp.ne.s32.totalorder %s90, %s91
      %p103 = scmp.eq.s32.totalorder %s34, 1
      %p104 = por %p102, %p103
      %p106 = scmp.ne.s32.totalorder %s91, %s105
      %p107 = scmp.eq.s32.totalorder %s34, 0
      %p108 = por %p106, %p107
      %s110 = sadd.s32 %s109, 1
      %p113 = scmp.eq.s32.totalorder %s28, 1
      %p114 = scmp.ne.s32.totalorder %s109, %s111
      %p115 = scmp.eq.s32.totalorder %s28, 0
      %p116 = por %p114, %p115
      %p117 = scmp.ne.s32.totalorder %s109, %s111
      %p118 = scmp.eq.s32.totalorder %s33, 1
      %p119 = por %p117, %p118
      %p120 = scmp.ne.s32.totalorder %s111, %s112
      %p121 = scmp.eq.s32.totalorder %s33, 0
      %p122 = por %p120, %p121
      %p123 = scmp.ne.s32.totalorder %s111, %s112
      %p124 = scmp.eq.s32.totalorder %s34, 1
      %p125 = por %p123, %p124
      %p127 = scmp.ne.s32.totalorder %s112, %s126
      %p128 = scmp.eq.s32.totalorder %s34, 0
      %p129 = por %p127, %p128
      %s131 = sadd.s32 %s130, 1
      %p134 = scmp.eq.s32.totalorder %s28, 1
      %p135 = scmp.ne.s32.totalorder %s130, %s132
      %p136 = scmp.eq.s32.totalorder %s28, 0
      %p137 = por %p135, %p136
      %p138 = scmp.ne.s32.totalorder %s130, %s132
      %p139 = scmp.eq.s32.totalorder %s33, 1
      %p140 = por %p138, %p139
      %p141 = scmp.ne.s32.totalorder %s132, %s133
      %p142 = scmp.eq.s32.totalorder %s33, 0
      %p143 = por %p141, %p142
      %p144 = scmp.ne.s32.totalorder %s132, %s133
      %p145 = scmp.eq.s32.totalorder %s34, 1
      %p146 = por %p144, %p145
      %p148 = scmp.ne.s32.totalorder %s133, %s147
      %p149 = scmp.eq.s32.totalorder %s34, 0
      %p150 = por %p148, %p149
      %s152 = sadd.s32 %s151, 1
      %p155 = scmp.eq.s32.totalorder %s28, 1
      %p156 = scmp.ne.s32.totalorder %s151, %s153
      %p157 = scmp.eq.s32.totalorder %s28, 0
      %p158 = por %p156, %p157
      %p159 = scmp.ne.s32.totalorder %s151, %s153
      %p160 = scmp.eq.s32.totalorder %s33, 1
      %p161 = por %p159, %p160
      %p162 = scmp.ne.s32.totalorder %s153, %s154
      %p163 = scmp.eq.s32.totalorder %s33, 0
      %p164 = por %p162, %p163
      %p165 = scmp.ne.s32.totalorder %s153, %s154
      %p166 = scmp.eq.s32.totalorder %s34, 1
      %p167 = por %p165, %p166
      %p169 = scmp.ne.s32.totalorder %s154, %s168
      %p170 = scmp.eq.s32.totalorder %s34, 0
      %p171 = por %p169, %p170
      %s173 = sadd.s32 %s172, 1
      %p176 = scmp.eq.s32.totalorder %s28, 1
      %p177 = scmp.ne.s32.totalorder %s172, %s174
      %p178 = scmp.eq.s32.totalorder %s28, 0
      %p179 = por %p177, %p178
      %p180 = scmp.ne.s32.totalorder %s172, %s174
      %p181 = scmp.eq.s32.totalorder %s33, 1
      %p182 = por %p180, %p181
      %p183 = scmp.ne.s32.totalorder %s174, %s175
      %p184 = scmp.eq.s32.totalorder %s33, 0
      %p185 = por %p183, %p184
      %p186 = scmp.ne.s32.totalorder %s174, %s175
      %p187 = scmp.eq.s32.totalorder %s34, 1
      %p188 = por %p186, %p187
      %p190 = scmp.ne.s32.totalorder %s175, %s189
      %p191 = scmp.eq.s32.totalorder %s34, 0
      %p192 = por %p190, %p191
      %s194 = sadd.s32 %s193, 1
      %p197 = scmp.eq.s32.totalorder %s28, 1
      %p198 = scmp.ne.s32.totalorder %s193, %s195
      %p199 = scmp.eq.s32.totalorder %s28, 0
      %p200 = por %p198, %p199
      %p201 = scmp.ne.s32.totalorder %s193, %s195
      %p202 = scmp.eq.s32.totalorder %s33, 1
      %p203 = por %p201, %p202
      %p204 = scmp.ne.s32.totalorder %s195, %s196
      %p205 = scmp.eq.s32.totalorder %s33, 0
      %p206 = por %p204, %p205
      %p207 = scmp.ne.s32.totalorder %s195, %s196
      %p208 = scmp.eq.s32.totalorder %s34, 1
      %p209 = por %p207, %p208
      %p211 = scmp.ne.s32.totalorder %s196, %s210
      %p212 = scmp.eq.s32.totalorder %s34, 0
      %p213 = por %p211, %p212
      %s215 = sadd.s32 %s214, 1
      %p218 = scmp.eq.s32.totalorder %s28, 1
      %p219 = scmp.ne.s32.totalorder %s214, %s216
      %p220 = scmp.eq.s32.totalorder %s28, 0
      %p221 = por %p219, %p220
      %p222 = scmp.ne.s32.totalorder %s214, %s216
      %p223 = scmp.eq.s32.totalorder %s33, 1
      %p224 = por %p222, %p223
      %p225 = scmp.ne.s32.totalorder %s216, %s217
      %p226 = scmp.eq.s32.totalorder %s33, 0
      %p227 = por %p225, %p226
      %p228 = scmp.ne.s32.totalorder %s216, %s217
      %p229 = scmp.eq.s32.totalorder %s34, 1
      %p230 = por %p228, %p229
      %p232 = scmp.ne.s32.totalorder %s217, %s231
      %p233 = scmp.eq.s32.totalorder %s34, 0
      %p234 = por %p232, %p233
      %s236 = sadd.s32 %s235, 1
      %p239 = scmp.eq.s32.totalorder %s28, 1
      %p240 = scmp.ne.s32.totalorder %s235, %s237
      %p241 = scmp.eq.s32.totalorder %s28, 0
      %p242 = por %p240, %p241
      %p243 = scmp.ne.s32.totalorder %s235, %s237
      %p244 = scmp.eq.s32.totalorder %s33, 1
      %p245 = por %p243, %p244
      %p246 = scmp.ne.s32.totalorder %s237, %s238
      %p247 = scmp.eq.s32.totalorder %s33, 0
      %p248 = por %p246, %p247
      %p249 = scmp.ne.s32.totalorder %s237, %s238
      %p250 = scmp.eq.s32.totalorder %s34, 1
      %p251 = por %p249, %p250
      %p253 = scmp.ne.s32.totalorder %s238, %s252
      %p254 = scmp.eq.s32.totalorder %s34, 0
      %p255 = por %p253, %p254
      %s256 = ssub.s32 %s28, %s35
      %p257 = scmp.eq.s32.totalorder %s256, 0
      %s259 = sadd.s32 %s258, 1
      %s260 = scalar_select %p257, %s258, %s259
      %p263 = pneg %p257
      %p264 = scmp.eq.s32.totalorder %s28, 1
      %p265 = por %p263, %p264
      %p266 = scmp.ne.s32.totalorder %s258, %s261
      %p267 = scmp.eq.s32.totalorder %s28, 0
      %p268 = por %p266, %p267
      %p269 = scmp.ne.s32.totalorder %s258, %s261
      %p270 = scmp.eq.s32.totalorder %s33, 1
      %p271 = por %p269, %p270
      %p272 = scmp.ne.s32.totalorder %s261, %s262
      %p273 = scmp.eq.s32.totalorder %s33, 0
      %p274 = por %p272, %p273
      %p275 = scmp.ne.s32.totalorder %s261, %s262
      %p276 = scmp.eq.s32.totalorder %s34, 1
      %p277 = por %p275, %p276
      %p279 = scmp.ne.s32.totalorder %s262, %s278
      %p280 = scmp.eq.s32.totalorder %s34, 0
      %p281 = por %p279, %p280
      %p282 = scmp.le.s32.totalorder 1, %s28
      %p283 = scmp.lt.s32.totalorder %s28, 3
      %p284 = pnand %p282, %p283
      %p285 = pneg %p284
      // Predicated region
      $region9: #{tpu_custom_call.1} parent=5 // pred_check
        _
      $region10: #{tpu_custom_call.1} parent=5 // pred_check_branch
        %287 = sbr.rel (%p284) target = $region12
      $region11: #{tpu_custom_call.1} parent=5 // pred_region
        %s288 = ssub.s32 %s28, 1
        // Predicated region
        $region13: #{tpu_custom_call.1} parent=11 // pred_check
          %p289 = pneg %p101
        $region14: #{tpu_custom_call.1} parent=11 // pred_check_branch
          %291 = sbr.rel (%p289) target = $region16
        $region15: #{tpu_custom_call.1} parent=11 // pred_region
          %293 = vsyncadd [#allocation6], 0
          %s294 = sshll.u32 %s2, 4
          %s295 = int_to_ptr.hbm [resolvable:$true] %s294
          %s296 = sshll.u32 [#allocation7], 4
          %s297 = int_to_ptr.vmem [resolvable:$true] %s296
          %302 = dma.hbm_to_vmem [thread:$0]  %s295, 512, %s297, [#allocation6], 64, 64, 4
        $region16: #{tpu_custom_call.1} parent=11 // pred_fallthru
          _
        // Predicated region
        $region17: #{tpu_custom_call.1} parent=11 // pred_check
          %p303 = pneg %p122
        $region18: #{tpu_custom_call.1} parent=11 // pred_check_branch
          %305 = sbr.rel (%p303) target = $region20
        $region19: #{tpu_custom_call.1} parent=11 // pred_region
          %307 = vsyncadd [#allocation9], 0
          %s308 = sshll.u32 %s3, 4
          %s309 = int_to_ptr.hbm [resolvable:$true] %s308
          %s310 = sshll.u32 [#allocation8], 4
          %s311 = int_to_ptr.vmem [resolvable:$true] %s310
          %316 = dma.hbm_to_vmem [thread:$0]  %s309, 32, %s311, [#allocation9], 16, 16, 1
        $region20: #{tpu_custom_call.1} parent=11 // pred_fallthru
          _
        // Predicated region
        $region21: #{tpu_custom_call.1} parent=11 // pred_check
          %p317 = pneg %p143
        $region22: #{tpu_custom_call.1} parent=11 // pred_check_branch
          %319 = sbr.rel (%p317) target = $region24
        $region23: #{tpu_custom_call.1} parent=11 // pred_region
          %321 = vsyncadd [#allocation9], 0
          %s322 = sshll.u32 %s4, 4
          %s323 = int_to_ptr.hbm [resolvable:$true] %s322
          %s324 = sshll.u32 [#allocation10], 4
          %s325 = int_to_ptr.vmem [resolvable:$true] %s324
          %330 = dma.hbm_to_vmem [thread:$0]  %s323, 512, %s325, [#allocation9], 64, 64, 4
        $region24: #{tpu_custom_call.1} parent=11 // pred_fallthru
          _
        // Predicated region
        $region25: #{tpu_custom_call.1} parent=11 // pred_check
          %p331 = pneg %p164
        $region26: #{tpu_custom_call.1} parent=11 // pred_check_branch
          %333 = sbr.rel (%p331) target = $region28
        $region27: #{tpu_custom_call.1} parent=11 // pred_region
          %335 = vsyncadd [#allocation12], 0
          %s336 = sshll.u32 %s5, 4
          %s337 = int_to_ptr.hbm [resolvable:$true] %s336
          %s338 = sshll.u32 [#allocation11], 4
          %s339 = int_to_ptr.vmem [resolvable:$true] %s338
          %344 = dma.hbm_to_vmem [thread:$0]  %s337, 32, %s339, [#allocation12], 16, 16, 1
        $region28: #{tpu_custom_call.1} parent=11 // pred_fallthru
          _
        // Predicated region
        $region29: #{tpu_custom_call.1} parent=11 // pred_check
          %p345 = pneg %p185
        $region30: #{tpu_custom_call.1} parent=11 // pred_check_branch
          %347 = sbr.rel (%p345) target = $region32
        $region31: #{tpu_custom_call.1} parent=11 // pred_region
          %349 = vsyncadd [#allocation12], 0
          %s350 = sshll.u32 %s6, 4
          %s351 = int_to_ptr.hbm [resolvable:$true] %s350
          %s352 = sshll.u32 [#allocation13], 4
          %s353 = int_to_ptr.vmem [resolvable:$true] %s352
          %358 = dma.hbm_to_vmem [thread:$0]  %s351, 512, %s353, [#allocation12], 64, 64, 4
        $region32: #{tpu_custom_call.1} parent=11 // pred_fallthru
          _
        // Predicated region
        $region33: #{tpu_custom_call.1} parent=11 // pred_check
          %p359 = pneg %p206
        $region34: #{tpu_custom_call.1} parent=11 // pred_check_branch
          %361 = sbr.rel (%p359) target = $region36
        $region35: #{tpu_custom_call.1} parent=11 // pred_region
          %363 = vsyncadd [#allocation15], 0
          %s364 = sshll.u32 %s7, 4
          %s365 = int_to_ptr.hbm [resolvable:$true] %s364
          %s366 = sshll.u32 [#allocation14], 4
          %s367 = int_to_ptr.vmem [resolvable:$true] %s366
          %372 = dma.hbm_to_vmem [thread:$0]  %s365, 32, %s367, [#allocation15], 16, 16, 1
        $region36: #{tpu_custom_call.1} parent=11 // pred_fallthru
          _
        // Predicated region
        $region37: #{tpu_custom_call.1} parent=11 // pred_check
          %p373 = pneg %p227
        $region38: #{tpu_custom_call.1} parent=11 // pred_check_branch
          %375 = sbr.rel (%p373) target = $region40
        $region39: #{tpu_custom_call.1} parent=11 // pred_region
          _
        $region40: #{tpu_custom_call.1} parent=11 // pred_fallthru
          _
        // Predicated region
        $region41: #{tpu_custom_call.1} parent=11 // pred_check
          %p376 = pneg %p248
        $region42: #{tpu_custom_call.1} parent=11 // pred_check_branch
          %378 = sbr.rel (%p376) target = $region44
        $region43: #{tpu_custom_call.1} parent=11 // pred_region
          _
        $region44: #{tpu_custom_call.1} parent=11 // pred_fallthru
          _
      $region12: #{tpu_custom_call.1} parent=5 // pred_fallthru
        _
      %p379 = scmp.lt.s32.totalorder %s28, 2
      // Predicated region
      $region45: #{tpu_custom_call.1} parent=5 // pred_check
        %p380 = pneg %p379
      $region46: #{tpu_custom_call.1} parent=5 // pred_check_branch
        %382 = sbr.rel (%p380) target = $region48
      $region47: #{tpu_custom_call.1} parent=5 // pred_region
        // Predicated region
        $region49: #{tpu_custom_call.1} parent=47 // pred_check
          %p383 = pneg %p48
        $region50: #{tpu_custom_call.1} parent=47 // pred_check_branch
          %385 = sbr.rel (%p383) target = $region52
        $region51: #{tpu_custom_call.1} parent=47 // pred_region
          %s386 = sand.u32 %s38, 1
          %s387 = scalar_lea.sflag [#allocation3], %s386
          %s388 = sand.u32 %s38, 1
          %s389 = scalar_lea.vmem [#allocation2], %s388
          %391 = vsyncadd %s387, 0
          %s392 = scalar_lea.hbm %s0, %s28
          %s394 = sshll.u32 %s392, 4
          %s395 = int_to_ptr.hbm [resolvable:$true] %s394
          %s396 = sshll.u32 %s389, 4
          %s397 = int_to_ptr.vmem [resolvable:$true] %s396
          %399 = dma.hbm_to_vmem [thread:$0]  %s395, 16, %s397, %s387
        $region52: #{tpu_custom_call.1} parent=47 // pred_fallthru
          _
        // Predicated region
        $region53: #{tpu_custom_call.1} parent=47 // pred_check
          %p400 = pneg %p74
        $region54: #{tpu_custom_call.1} parent=47 // pred_check_branch
          %402 = sbr.rel (%p400) target = $region56
        $region55: #{tpu_custom_call.1} parent=47 // pred_region
          %s403 = sand.u32 %s28, 1
          %s404 = scalar_lea.sflag [#allocation6], %s403
          %s405 = sand.u32 %s64, 1
          %s406 = smul.addr %s405, 8
          %s407 = scalar_lea.vmem [#allocation5], %s406
          %409 = vsyncadd %s404, 0
          %s410 = smul.addr %s28, 8
          %s411 = scalar_lea.hbm %s1, %s410
          %s413 = sshll.u32 %s411, 4
          %s414 = int_to_ptr.hbm [resolvable:$true] %s413
          %s415 = sshll.u32 %s407, 4
          %s416 = int_to_ptr.vmem [resolvable:$true] %s415
          %418 = dma.hbm_to_vmem [thread:$0]  %s414, 128, %s416, %s404
        $region56: #{tpu_custom_call.1} parent=47 // pred_fallthru
          _
      $region48: #{tpu_custom_call.1} parent=5 // pred_fallthru
        _
      %p419 = scmp.le.s32.totalorder 1, %s28
      %p420 = scmp.lt.s32.totalorder %s28, 3
      %p421 = pnand %p419, %p420
      %p422 = pneg %p421
      // Predicated region
      $region57: #{tpu_custom_call.1} parent=5 // pred_check
        _
      $region58: #{tpu_custom_call.1} parent=5 // pred_check_branch
        %424 = sbr.rel (%p421) target = $region60
      $region59: #{tpu_custom_call.1} parent=5 // pred_region
        %s425 = ssub.s32 %s28, 1
        %s426 = sand.u32 %s41, 1
        %s427 = scalar_lea.sflag [#allocation3], %s426
        %s428 = sand.u32 %s41, 1
        %s429 = scalar_lea.vmem [#allocation2], %s428
        // Predicated region
        $region61: #{tpu_custom_call.1} parent=59 // pred_check
          %p430 = pneg %p54
        $region62: #{tpu_custom_call.1} parent=59 // pred_check_branch
          %432 = sbr.rel (%p430) target = $region64
        $region63: #{tpu_custom_call.1} parent=59 // pred_region
          %434 = dma.done %s427, 16
        $region64: #{tpu_custom_call.1} parent=59 // pred_fallthru
          _
        %s435 = sand.u32 %s33, 1
        %s436 = scalar_lea.sflag [#allocation6], %s435
        %s437 = sand.u32 %s67, 1
        %s438 = smul.addr %s437, 8
        %s439 = scalar_lea.vmem [#allocation5], %s438
        // Predicated region
        $region65: #{tpu_custom_call.1} parent=59 // pred_check
          %p440 = pneg %p80
        $region66: #{tpu_custom_call.1} parent=59 // pred_check_branch
          %442 = sbr.rel (%p440) target = $region68
        $region67: #{tpu_custom_call.1} parent=59 // pred_region
          %444 = dma.done %s436, 128
        $region68: #{tpu_custom_call.1} parent=59 // pred_fallthru
          _
        // Predicated region
        $region69: #{tpu_custom_call.1} parent=59 // pred_check
          %p445 = pneg %p101
        $region70: #{tpu_custom_call.1} parent=59 // pred_check_branch
          %447 = sbr.rel (%p445) target = $region72
        $region71: #{tpu_custom_call.1} parent=59 // pred_region
          %449 = dma.done [#allocation6], 512
        $region72: #{tpu_custom_call.1} parent=59 // pred_fallthru
          _
        // Predicated region
        $region73: #{tpu_custom_call.1} parent=59 // pred_check
          %p450 = pneg %p122
        $region74: #{tpu_custom_call.1} parent=59 // pred_check_branch
          %452 = sbr.rel (%p450) target = $region76
        $region75: #{tpu_custom_call.1} parent=59 // pred_region
          %454 = dma.done [#allocation9], 32
        $region76: #{tpu_custom_call.1} parent=59 // pred_fallthru
          _
        // Predicated region
        $region77: #{tpu_custom_call.1} parent=59 // pred_check
          %p455 = pneg %p143
        $region78: #{tpu_custom_call.1} parent=59 // pred_check_branch
          %457 = sbr.rel (%p455) target = $region80
        $region79: #{tpu_custom_call.1} parent=59 // pred_region
          %459 = dma.done [#allocation9], 512
        $region80: #{tpu_custom_call.1} parent=59 // pred_fallthru
          _
        // Predicated region
        $region81: #{tpu_custom_call.1} parent=59 // pred_check
          %p460 = pneg %p164
        $region82: #{tpu_custom_call.1} parent=59 // pred_check_branch
          %462 = sbr.rel (%p460) target = $region84
        $region83: #{tpu_custom_call.1} parent=59 // pred_region
          %464 = dma.done [#allocation12], 32
        $region84: #{tpu_custom_call.1} parent=59 // pred_fallthru
          _
        // Predicated region
        $region85: #{tpu_custom_call.1} parent=59 // pred_check
          %p465 = pneg %p185
        $region86: #{tpu_custom_call.1} parent=59 // pred_check_branch
          %467 = sbr.rel (%p465) target = $region88
        $region87: #{tpu_custom_call.1} parent=59 // pred_region
          %469 = dma.done [#allocation12], 512
        $region88: #{tpu_custom_call.1} parent=59 // pred_fallthru
          _
        // Predicated region
        $region89: #{tpu_custom_call.1} parent=59 // pred_check
          %p470 = pneg %p206
        $region90: #{tpu_custom_call.1} parent=59 // pred_check_branch
          %472 = sbr.rel (%p470) target = $region92
        $region91: #{tpu_custom_call.1} parent=59 // pred_region
          %474 = dma.done [#allocation15], 32
        $region92: #{tpu_custom_call.1} parent=59 // pred_fallthru
          _
        %s475 = sand.u32 %s41, 1
        %s476 = scalar_lea.sflag [#allocation3], %s475
        %s477 = sand.u32 %s41, 1
        %s478 = scalar_lea.vmem [#allocation2], %s477
        %p479 = pneg %p54
        %p480 = pneg %p51
        %s481 = sand.u32 %s33, 1
        %s482 = scalar_lea.sflag [#allocation6], %s481
        %s483 = sand.u32 %s67, 1
        %s484 = smul.addr %s483, 8
        %s485 = scalar_lea.vmem [#allocation5], %s484
        %p486 = pneg %p80
        %p487 = pneg %p77
        %p488 = pneg %p101
        %p489 = pneg %p98
        %p490 = pneg %p122
        %p491 = pneg %p119
        %p492 = pneg %p143
        %p493 = pneg %p140
        %p494 = pneg %p164
        %p495 = pneg %p161
        %p496 = pneg %p185
        %p497 = pneg %p182
        %p498 = pneg %p206
        %p499 = pneg %p203
        %p500 = pneg %p227
        %p501 = pneg %p224
        %p502 = pneg %p248
        %p503 = pneg %p245
        %p504 = pneg %p274
        %p505 = pneg %p271
        %s506 = sand.u32 %s261, 1
        %s507 = scalar_lea.sflag [#allocation4], %s506
        %s508 = sand.u32 %s261, 1
        %s509 = smul.addr %s508, 8
        %s510 = scalar_lea.vmem [#allocation16], %s509
        %v512 = vld [vmem:[%s439] sm:$0xff]
        %v513 = vld [vmem:[%s429] sm:$0x1]
        %vm514 = vcmp.ne.s32.totalorder %v513, 0
        %v515 = vsel %vm514, -1e+09, 0.0
        %v516 = vld [vmem:[#allocation7] sm:$0xf]
        %v517 = vld [vmem:[#allocation7 + $0x4] sm:$0xf]
        %v518 = vld [vmem:[#allocation7 + $0x8] sm:$0xf]
        %v519 = vld [vmem:[#allocation7 + $0xc] sm:$0xf]
        %v520 = vld [vmem:[#allocation8] sm:$0x1]
        %v521 = vld [vmem:[#allocation10] sm:$0xf]
        %v522 = vld [vmem:[#allocation10 + $0x4] sm:$0xf]
        %v523 = vld [vmem:[#allocation10 + $0x8] sm:$0xf]
        %v524 = vld [vmem:[#allocation10 + $0xc] sm:$0xf]
        %v525 = vld [vmem:[#allocation11] sm:$0x1]
        %v526 = vld [vmem:[#allocation13] sm:$0xf]
        %v527 = vld [vmem:[#allocation13 + $0x4] sm:$0xf]
        %v528 = vld [vmem:[#allocation13 + $0x8] sm:$0xf]
        %v529 = vld [vmem:[#allocation13 + $0xc] sm:$0xf]
        %v530 = vld [vmem:[#allocation14] sm:$0x1]
        %v531 = vld [vmem:[%s8] sm:$0x3]
        %v532 = vld [vmem:[%s9] sm:$0x3]
        %v533 = vpack.c.bf16 %v512, %v512
        %v535 = vperm.slane %v520, 0
        %v541 = vunpack.c.l.b16 %v516
        %v542 = vunpack.c.l.b16 %v517
        %v543 = vunpack.c.l.b16 %v518
        %v544 = vunpack.c.l.b16 %v519
        %v545 = vpack.c.b16 %v542, %v541
        %v546 = vpack.c.b16 %v544, %v543
        %vm549 = vcmask 261120
        %v551 = vsel %vm549, %v533, 0
        %553 = vmatpush.bf16.msra.mxu0 0
        %554 = vmatpush.bf16.msra.mxu0 0
        %555 = vmatpush.bf16.msra.mxu0 0
        %556 = vmatpush.bf16.msra.mxu0 0
        %557 = vmatpush.bf16.msra.mxu0 0
        %558 = vmatpush.bf16.msra.mxu0 0
        %559 = vmatpush.bf16.msra.mxu0 %v546
        %560 = vmatpush.bf16.msra.mxu0 %v545
        %561 = vmatmul.bf16.gmra.mxu0 %v551
        %v562 = vpop.f32.mrf.mxu0
        %v563 = vadd.f32 %v535, %v562
        %v564 = vpop.f32.mrf.mxu0
        %565 = vdwg.mxu0
        %v566 = vmul.f32 %v563, 0.35355338
        %v568 = vperm.slane %v515, 0
        %571 = vrot.lane.b32.xlu0 %v563, 96
        %v572 = vpop.permute.xlu0 %571
        %vm573 = vcmask 64512
        %v575 = vsel %vm573, %v566, 0
        %v577 = vsel %vm573, %v572, 0
        %579 = vmatpush.xpose.msra.mxu0 0.0
        %580 = vmatpush.xpose.msra.mxu0 0.0
        %581 = vmatpush.xpose.msra.mxu0 0.0
        %582 = vmatpush.xpose.msra.mxu0 0.0
        %583 = vmatpush.xpose.msra.mxu0 0.0
        %584 = vmatpush.xpose.msra.mxu0 0.0
        %585 = vmatpush.xpose.msra.mxu0 0.0
        %586 = vmatpush.xpose.msra.mxu0 0.0
        %587 = vmatpush.xpose.msra.mxu0 0.0
        %588 = vmatpush.xpose.msra.mxu0 0.0
        %589 = vmatpush.xpose.msra.mxu0 0.0
        %590 = vmatpush.xpose.msra.mxu0 0.0
        %591 = vmatpush.xpose.msra.mxu0 0.0
        %592 = vmatpush.xpose.msra.mxu0 0.0
        %593 = vmatpush.xpose.msra.mxu0 0.0
        %594 = vmatpush.xpose.msra.mxu0 %v577
        %595 = vmatmul.f32.gmra.mxu0 %v575
        %v596 = vpop.f32.mrf.mxu0
        %v597 = vadd.f32 %v568, %v596
        %598 = vdwg.mxu0
        %v599 = vsel %vm573, %v597, -inf
        %600 = vmax.xlane.f32.xlu0 %v599
        %v601 = vpop.xlane.xlu0 %600
        %v602 = vsub.f32 %v597, %v601
        %v603 = vmul.f32 %v602, 1.442695
        %v604 = vpow.pop %v603
        %v605 = vsel %vm573, %v604, 0.0
        %606 = vadd.xlane.f32.xlu0 %v605
        %v607 = vpop.xlane.xlu0 %606
        %v608 = vrcp.pop %v607
        %v609 = vmul.f32 %v604, %v608
        %610 = vrot.lane.b32.xlu0 %v563, 64
        %v611 = vpop.permute.xlu0 %610
        %v614 = vsel %vm573, %v609, 0
        %616 = vmatpush.msra.mxu0 0.0
        %617 = vmatpush.msra.mxu0 0.0
        %618 = vmatpush.msra.mxu0 0.0
        %619 = vmatpush.msra.mxu0 0.0
        %620 = vmatpush.msra.mxu0 0.0
        %621 = vmatpush.msra.mxu0 0.0
        %622 = vmatpush.msra.mxu0 0.0
        %623 = vmatpush.msra.mxu0 0.0
        %624 = vmatpush.msra.mxu0 0.0
        %625 = vmatpush.msra.mxu0 0.0
        %626 = vmatpush.msra.mxu0 0.0
        %627 = vmatpush.msra.mxu0 0.0
        %628 = vmatpush.msra.mxu0 0.0
        %629 = vmatpush.msra.mxu0 0.0
        %630 = vmatpush.msra.mxu0 0.0
        %631 = vmatpush.msra.mxu0 %v611
        %632 = vmatmul.f32.gmra.mxu0 %v614
        %v633 = vpop.f32.mrf.mxu0
        %v634 = vadd.f32 0.0, %v633
        %635 = vdwg.mxu0
        %636 = vrot.lane.b32.xlu0 %v566, 120
        %v637 = vpop.permute.xlu0 %636
        %638 = vrot.lane.b32.xlu0 %v563, 88
        %v639 = vpop.permute.xlu0 %638
        %v640 = vsel %vm573, %v637, 0
        %v642 = vsel %vm573, %v639, 0
        %644 = vmatpush.xpose.msra.mxu0 0.0
        %645 = vmatpush.xpose.msra.mxu0 0.0
        %646 = vmatpush.xpose.msra.mxu0 0.0
        %647 = vmatpush.xpose.msra.mxu0 0.0
        %648 = vmatpush.xpose.msra.mxu0 0.0
        %649 = vmatpush.xpose.msra.mxu0 0.0
        %650 = vmatpush.xpose.msra.mxu0 0.0
        %651 = vmatpush.xpose.msra.mxu0 0.0
        %652 = vmatpush.xpose.msra.mxu0 0.0
        %653 = vmatpush.xpose.msra.mxu0 0.0
        %654 = vmatpush.xpose.msra.mxu0 0.0
        %655 = vmatpush.xpose.msra.mxu0 0.0
        %656 = vmatpush.xpose.msra.mxu0 0.0
        %657 = vmatpush.xpose.msra.mxu0 0.0
        %658 = vmatpush.xpose.msra.mxu0 0.0
        %659 = vmatpush.xpose.msra.mxu0 %v642
        %660 = vmatmul.f32.gmra.mxu0 %v640
        %v661 = vpop.f32.mrf.mxu0
        %v662 = vadd.f32 %v568, %v661
        %663 = vdwg.mxu0
        %v664 = vsel %vm573, %v662, -inf
        %665 = vmax.xlane.f32.xlu0 %v664
        %v666 = vpop.xlane.xlu0 %665
        %v667 = vsub.f32 %v662, %v666
        %v668 = vmul.f32 %v667, 1.442695
        %v669 = vpow.pop %v668
        %v670 = vsel %vm573, %v669, 0.0
        %671 = vadd.xlane.f32.xlu0 %v670
        %v672 = vpop.xlane.xlu0 %671
        %v673 = vrcp.pop %v672
        %v674 = vmul.f32 %v669, %v673
        %675 = vrot.lane.b32.xlu0 %v563, 56
        %v676 = vpop.permute.xlu0 %675
        %v679 = vsel %vm573, %v674, 0
        %681 = vmatpush.msra.mxu0 0.0
        %682 = vmatpush.msra.mxu0 0.0
        %683 = vmatpush.msra.mxu0 0.0
        %684 = vmatpush.msra.mxu0 0.0
        %685 = vmatpush.msra.mxu0 0.0
        %686 = vmatpush.msra.mxu0 0.0
        %687 = vmatpush.msra.mxu0 0.0
        %688 = vmatpush.msra.mxu0 0.0
        %689 = vmatpush.msra.mxu0 0.0
        %690 = vmatpush.msra.mxu0 0.0
        %691 = vmatpush.msra.mxu0 0.0
        %692 = vmatpush.msra.mxu0 0.0
        %693 = vmatpush.msra.mxu0 0.0
        %694 = vmatpush.msra.mxu0 0.0
        %695 = vmatpush.msra.mxu0 0.0
        %696 = vmatpush.msra.mxu0 %v676
        %697 = vmatmul.f32.gmra.mxu0 %v679
        %v698 = vpop.f32.mrf.mxu0
        %v699 = vadd.f32 0.0, %v698
        %700 = vdwg.mxu0
        %701 = vrot.lane.b32.xlu0 %v566, 112
        %v702 = vpop.permute.xlu0 %701
        %703 = vrot.lane.b32.xlu0 %v563, 80
        %v704 = vpop.permute.xlu0 %703
        %v705 = vsel %vm573, %v702, 0
        %v707 = vsel %vm573, %v704, 0
        %709 = vmatpush.xpose.msra.mxu0 0.0
        %710 = vmatpush.xpose.msra.mxu0 0.0
        %711 = vmatpush.xpose.msra.mxu0 0.0
        %712 = vmatpush.xpose.msra.mxu0 0.0
        %713 = vmatpush.xpose.msra.mxu0 0.0
        %714 = vmatpush.xpose.msra.mxu0 0.0
        %715 = vmatpush.xpose.msra.mxu0 0.0
        %716 = vmatpush.xpose.msra.mxu0 0.0
        %717 = vmatpush.xpose.msra.mxu0 0.0
        %718 = vmatpush.xpose.msra.mxu0 0.0
        %719 = vmatpush.xpose.msra.mxu0 0.0
        %720 = vmatpush.xpose.msra.mxu0 0.0
        %721 = vmatpush.xpose.msra.mxu0 0.0
        %722 = vmatpush.xpose.msra.mxu0 0.0
        %723 = vmatpush.xpose.msra.mxu0 0.0
        %724 = vmatpush.xpose.msra.mxu0 %v707
        %725 = vmatmul.f32.gmra.mxu0 %v705
        %v726 = vpop.f32.mrf.mxu0
        %v727 = vadd.f32 %v568, %v726
        %728 = vdwg.mxu0
        %v729 = vsel %vm573, %v727, -inf
        %730 = vmax.xlane.f32.xlu0 %v729
        %v731 = vpop.xlane.xlu0 %730
        %v732 = vsub.f32 %v727, %v731
        %v733 = vmul.f32 %v732, 1.442695
        %v734 = vpow.pop %v733
        %v735 = vsel %vm573, %v734, 0.0
        %736 = vadd.xlane.f32.xlu0 %v735
        %v737 = vpop.xlane.xlu0 %736
        %v738 = vrcp.pop %v737
        %v739 = vmul.f32 %v734, %v738
        %740 = vrot.lane.b32.xlu0 %v563, 48
        %v741 = vpop.permute.xlu0 %740
        %v744 = vsel %vm573, %v739, 0
        %746 = vmatpush.msra.mxu0 0.0
        %747 = vmatpush.msra.mxu0 0.0
        %748 = vmatpush.msra.mxu0 0.0
        %749 = vmatpush.msra.mxu0 0.0
        %750 = vmatpush.msra.mxu0 0.0
        %751 = vmatpush.msra.mxu0 0.0
        %752 = vmatpush.msra.mxu0 0.0
        %753 = vmatpush.msra.mxu0 0.0
        %754 = vmatpush.msra.mxu0 0.0
        %755 = vmatpush.msra.mxu0 0.0
        %756 = vmatpush.msra.mxu0 0.0
        %757 = vmatpush.msra.mxu0 0.0
        %758 = vmatpush.msra.mxu0 0.0
        %759 = vmatpush.msra.mxu0 0.0
        %760 = vmatpush.msra.mxu0 0.0
        %761 = vmatpush.msra.mxu0 %v741
        %762 = vmatmul.f32.gmra.mxu0 %v744
        %v763 = vpop.f32.mrf.mxu0
        %v764 = vadd.f32 0.0, %v763
        %765 = vdwg.mxu0
        %766 = vrot.lane.b32.xlu0 %v566, 104
        %v767 = vpop.permute.xlu0 %766
        %768 = vrot.lane.b32.xlu0 %v563, 72
        %v769 = vpop.permute.xlu0 %768
        %v770 = vsel %vm573, %v767, 0
        %v772 = vsel %vm573, %v769, 0
        %774 = vmatpush.xpose.msra.mxu0 0.0
        %775 = vmatpush.xpose.msra.mxu0 0.0
        %776 = vmatpush.xpose.msra.mxu0 0.0
        %777 = vmatpush.xpose.msra.mxu0 0.0
        %778 = vmatpush.xpose.msra.mxu0 0.0
        %779 = vmatpush.xpose.msra.mxu0 0.0
        %780 = vmatpush.xpose.msra.mxu0 0.0
        %781 = vmatpush.xpose.msra.mxu0 0.0
        %782 = vmatpush.xpose.msra.mxu0 0.0
        %783 = vmatpush.xpose.msra.mxu0 0.0
        %784 = vmatpush.xpose.msra.mxu0 0.0
        %785 = vmatpush.xpose.msra.mxu0 0.0
        %786 = vmatpush.xpose.msra.mxu0 0.0
        %787 = vmatpush.xpose.msra.mxu0 0.0
        %788 = vmatpush.xpose.msra.mxu0 0.0
        %789 = vmatpush.xpose.msra.mxu0 %v772
        %790 = vmatmul.f32.gmra.mxu0 %v770
        %v791 = vpop.f32.mrf.mxu0
        %v792 = vadd.f32 %v568, %v791
        %793 = vdwg.mxu0
        %v794 = vsel %vm573, %v792, -inf
        %795 = vmax.xlane.f32.xlu0 %v794
        %v796 = vpop.xlane.xlu0 %795
        %v797 = vsub.f32 %v792, %v796
        %v798 = vmul.f32 %v797, 1.442695
        %v799 = vpow.pop %v798
        %v800 = vsel %vm573, %v799, 0.0
        %801 = vadd.xlane.f32.xlu0 %v800
        %v802 = vpop.xlane.xlu0 %801
        %v803 = vrcp.pop %v802
        %v804 = vmul.f32 %v799, %v803
        %805 = vrot.lane.b32.xlu0 %v563, 40
        %v806 = vpop.permute.xlu0 %805
        %v809 = vsel %vm573, %v804, 0
        %811 = vmatpush.msra.mxu0 0.0
        %812 = vmatpush.msra.mxu0 0.0
        %813 = vmatpush.msra.mxu0 0.0
        %814 = vmatpush.msra.mxu0 0.0
        %815 = vmatpush.msra.mxu0 0.0
        %816 = vmatpush.msra.mxu0 0.0
        %817 = vmatpush.msra.mxu0 0.0
        %818 = vmatpush.msra.mxu0 0.0
        %819 = vmatpush.msra.mxu0 0.0
        %820 = vmatpush.msra.mxu0 0.0
        %821 = vmatpush.msra.mxu0 0.0
        %822 = vmatpush.msra.mxu0 0.0
        %823 = vmatpush.msra.mxu0 0.0
        %824 = vmatpush.msra.mxu0 0.0
        %825 = vmatpush.msra.mxu0 0.0
        %826 = vmatpush.msra.mxu0 %v806
        %827 = vmatmul.f32.gmra.mxu0 %v809
        %v828 = vpop.f32.mrf.mxu0
        %v829 = vadd.f32 0.0, %v828
        %830 = vdwg.mxu0
        %832 = vrot.lane.b32.xlu0 %v699, 8
        %v833 = vpop.permute.xlu0 %832
        %836 = vrot.lane.b32.xlu0 %v764, 16
        %v837 = vpop.permute.xlu0 %836
        %840 = vrot.lane.b32.xlu0 %v829, 24
        %v841 = vpop.permute.xlu0 %840
        %v843 = vsel %vm573, %v634, %v833
        %vm844 = vcmask 130048
        %v845 = vsel %vm844, %v843, %v837
        %vm846 = vcmask 195584
        %v847 = vsel %vm846, %v845, %v841
        %v848 = vpack.c.bf16 %v847, %v847
        %v850 = vperm.slane %v525, 0
        %v856 = vunpack.c.l.b16 %v521
        %v857 = vunpack.c.l.b16 %v522
        %v858 = vunpack.c.l.b16 %v523
        %v859 = vunpack.c.l.b16 %v524
        %v860 = vpack.c.b16 %v857, %v856
        %v861 = vpack.c.b16 %v859, %v858
        %v865 = vsel %vm549, %v848, 0
        %867 = vmatpush.bf16.msra.mxu0 0
        %868 = vmatpush.bf16.msra.mxu0 0
        %869 = vmatpush.bf16.msra.mxu0 0
        %870 = vmatpush.bf16.msra.mxu0 0
        %871 = vmatpush.bf16.msra.mxu0 0
        %872 = vmatpush.bf16.msra.mxu0 0
        %873 = vmatpush.bf16.msra.mxu0 %v861
        %874 = vmatpush.bf16.msra.mxu0 %v860
        %875 = vmatmul.bf16.gmra.mxu0 %v865
        %v876 = vpop.f32.mrf.mxu0
        %v877 = vadd.f32 %v850, %v876
        %v878 = vpop.f32.mrf.mxu0
        %879 = vdwg.mxu0
        %v880 = vadd.f32 %v512, %v877
        %v881 = vsel %vm549, %v880, 0.0
        %882 = vadd.xlane.f32.xlu0 %v881
        %v883 = vpop.xlane.xlu0 %882
        %v884 = vrcp.pop 32.0
        %v885 = vmul.f32 32.0, %v884
        %v886 = vsub.f32 1.0, %v885
        %v887 = vmul.f32 %v884, %v886
        %v888 = vadd.f32 %v884, %v887
        %vm889 = vweird.f32 %v884
        %v890 = vsel %vm889, %v884, %v888
        %v891 = vmul.f32 %v883, %v890
        %v892 = vsub.f32 %v880, %v891
        %v893 = vmul.f32 %v892, %v892
        %v894 = vsel %vm549, %v893, 0.0
        %895 = vadd.xlane.f32.xlu0 %v894
        %v896 = vpop.xlane.xlu0 %895
        %v897 = vmul.f32 %v896, %v890
        %v898 = vadd.f32 %v897, 1e-05
        %v899 = vrsqrt.pop %v898
        %v900 = vmul.f32 %v899, %v898
        %v901 = vmul.f32 %v900, %v899
        %v902 = vmul.f32 0.5, %v901
        %v903 = vsub.f32 1.5, %v902
        %v904 = vmul.f32 %v899, %v903
        %vm905 = vweird.f32 %v898
        %vm906 = vweird.f32 %v899
        %vm907 = vmor %vm905, %vm906
        %v908 = vsel %vm907, %v899, %v904
        %v909 = vmul.f32 %v892, %v908
        %v910 = vperm.slane %v531, 0
        %v911 = vmul.f32 %v909, %v910
        %v912 = vperm.slane %v532, 0
        %v913 = vadd.f32 %v911, %v912
        %v914 = vpack.c.bf16 %v913, %v913
        %v916 = vperm.slane %v530, 0
        %v922 = vunpack.c.l.b16 %v526
        %v923 = vunpack.c.l.b16 %v527
        %v924 = vunpack.c.l.b16 %v528
        %v925 = vunpack.c.l.b16 %v529
        %v926 = vpack.c.b16 %v923, %v922
        %v927 = vpack.c.b16 %v925, %v924
        %v931 = vsel %vm549, %v914, 0
        %933 = vmatpush.bf16.msra.mxu0 0
        %934 = vmatpush.bf16.msra.mxu0 0
        %935 = vmatpush.bf16.msra.mxu0 0
        %936 = vmatpush.bf16.msra.mxu0 0
        %937 = vmatpush.bf16.msra.mxu0 0
        %938 = vmatpush.bf16.msra.mxu0 0
        %939 = vmatpush.bf16.msra.mxu0 %v927
        %940 = vmatpush.bf16.msra.mxu0 %v926
        %941 = vmatmul.bf16.gmra.mxu0 %v931
        %v942 = vpop.f32.mrf.mxu0
        %v943 = vadd.f32 %v916, %v942
        %v944 = vpop.f32.mrf.mxu0
        %945 = vdwg.mxu0
        %v946 = vadd.f32 %v913, %v943
        %v947 = vsel %vm549, %v946, 0.0
        %948 = vadd.xlane.f32.xlu0 %v947
        %v949 = vpop.xlane.xlu0 %948
        %v950 = vmul.f32 %v949, %v890
        %v951 = vsub.f32 %v946, %v950
        %v952 = vmul.f32 %v951, %v951
        %v953 = vsel %vm549, %v952, 0.0
        %954 = vadd.xlane.f32.xlu0 %v953
        %v955 = vpop.xlane.xlu0 %954
        %v956 = vmul.f32 %v955, %v890
        %v957 = vadd.f32 %v956, 1e-05
        %v958 = vrsqrt.pop %v957
        %v959 = vmul.f32 %v958, %v957
        %v960 = vmul.f32 %v959, %v958
        %v961 = vmul.f32 0.5, %v960
        %v962 = vsub.f32 1.5, %v961
        %v963 = vmul.f32 %v958, %v962
        %vm964 = vweird.f32 %v957
        %vm965 = vweird.f32 %v958
        %vm966 = vmor %vm964, %vm965
        %v967 = vsel %vm966, %v958, %v963
        %v968 = vmul.f32 %v951, %v967
        %v969 = vperm.slane %v531, 1
        %v970 = vmul.f32 %v968, %v969
        %v971 = vperm.slane %v532, 1
        %v972 = vadd.f32 %v970, %v971
        %s973 = scalar_lea.vmem [#allocation7], 16
        %v974 = vld [vmem:[%s973] sm:$0xf]
        %v975 = vld [vmem:[%s973 + $0x4] sm:$0xf]
        %v976 = vld [vmem:[%s973 + $0x8] sm:$0xf]
        %v977 = vld [vmem:[%s973 + $0xc] sm:$0xf]
        %s978 = scalar_lea.vmem [#allocation8], 1
        %v979 = vld [vmem:[%s978] sm:$0x1]
        %s980 = scalar_lea.vmem [#allocation10], 16
        %v981 = vld [vmem:[%s980] sm:$0xf]
        %v982 = vld [vmem:[%s980 + $0x4] sm:$0xf]
        %v983 = vld [vmem:[%s980 + $0x8] sm:$0xf]
        %v984 = vld [vmem:[%s980 + $0xc] sm:$0xf]
        %s985 = scalar_lea.vmem [#allocation11], 1
        %v986 = vld [vmem:[%s985] sm:$0x1]
        %s987 = scalar_lea.vmem [#allocation13], 16
        %v988 = vld [vmem:[%s987] sm:$0xf]
        %v989 = vld [vmem:[%s987 + $0x4] sm:$0xf]
        %v990 = vld [vmem:[%s987 + $0x8] sm:$0xf]
        %v991 = vld [vmem:[%s987 + $0xc] sm:$0xf]
        %s992 = scalar_lea.vmem [#allocation14], 1
        %v993 = vld [vmem:[%s992] sm:$0x1]
        %s994 = scalar_lea.vmem %s8, 2
        %v995 = vld [vmem:[%s994] sm:$0x3]
        %s996 = scalar_lea.vmem %s9, 2
        %v997 = vld [vmem:[%s996] sm:$0x3]
        %v998 = vpack.c.bf16 %v972, %v972
        %v1000 = vperm.slane %v979, 0
        %v1006 = vunpack.c.l.b16 %v974
        %v1007 = vunpack.c.l.b16 %v975
        %v1008 = vunpack.c.l.b16 %v976
        %v1009 = vunpack.c.l.b16 %v977
        %v1010 = vpack.c.b16 %v1007, %v1006
        %v1011 = vpack.c.b16 %v1009, %v1008
        %v1015 = vsel %vm549, %v998, 0
        %1017 = vmatpush.bf16.msra.mxu0 0
        %1018 = vmatpush.bf16.msra.mxu0 0
        %1019 = vmatpush.bf16.msra.mxu0 0
        %1020 = vmatpush.bf16.msra.mxu0 0
        %1021 = vmatpush.bf16.msra.mxu0 0
        %1022 = vmatpush.bf16.msra.mxu0 0
        %1023 = vmatpush.bf16.msra.mxu0 %v1011
        %1024 = vmatpush.bf16.msra.mxu0 %v1010
        %1025 = vmatmul.bf16.gmra.mxu0 %v1015
        %v1026 = vpop.f32.mrf.mxu0
        %v1027 = vadd.f32 %v1000, %v1026
        %v1028 = vpop.f32.mrf.mxu0
        %1029 = vdwg.mxu0
        %v1030 = vmul.f32 %v1027, 0.35355338
        %1032 = vrot.lane.b32.xlu0 %v1027, 96
        %v1033 = vpop.permute.xlu0 %1032
        %v1035 = vsel %vm573, %v1030, 0
        %v1037 = vsel %vm573, %v1033, 0
        %1039 = vmatpush.xpose.msra.mxu0 0.0
        %1040 = vmatpush.xpose.msra.mxu0 0.0
        %1041 = vmatpush.xpose.msra.mxu0 0.0
        %1042 = vmatpush.xpose.msra.mxu0 0.0
        %1043 = vmatpush.xpose.msra.mxu0 0.0
        %1044 = vmatpush.xpose.msra.mxu0 0.0
        %1045 = vmatpush.xpose.msra.mxu0 0.0
        %1046 = vmatpush.xpose.msra.mxu0 0.0
        %1047 = vmatpush.xpose.msra.mxu0 0.0
        %1048 = vmatpush.xpose.msra.mxu0 0.0
        %1049 = vmatpush.xpose.msra.mxu0 0.0
        %1050 = vmatpush.xpose.msra.mxu0 0.0
        %1051 = vmatpush.xpose.msra.mxu0 0.0
        %1052 = vmatpush.xpose.msra.mxu0 0.0
        %1053 = vmatpush.xpose.msra.mxu0 0.0
        %1054 = vmatpush.xpose.msra.mxu0 %v1037
        %1055 = vmatmul.f32.gmra.mxu0 %v1035
        %v1056 = vpop.f32.mrf.mxu0
        %v1057 = vadd.f32 %v568, %v1056
        %1058 = vdwg.mxu0
        %v1059 = vsel %vm573, %v1057, -inf
        %1060 = vmax.xlane.f32.xlu0 %v1059
        %v1061 = vpop.xlane.xlu0 %1060
        %v1062 = vsub.f32 %v1057, %v1061
        %v1063 = vmul.f32 %v1062, 1.442695
        %v1064 = vpow.pop %v1063
        %v1065 = vsel %vm573, %v1064, 0.0
        %1066 = vadd.xlane.f32.xlu0 %v1065
        %v1067 = vpop.xlane.xlu0 %1066
        %v1068 = vrcp.pop %v1067
        %v1069 = vmul.f32 %v1064, %v1068
        %1070 = vrot.lane.b32.xlu0 %v1027, 64
        %v1071 = vpop.permute.xlu0 %1070
        %v1074 = vsel %vm573, %v1069, 0
        %1076 = vmatpush.msra.mxu0 0.0
        %1077 = vmatpush.msra.mxu0 0.0
        %1078 = vmatpush.msra.mxu0 0.0
        %1079 = vmatpush.msra.mxu0 0.0
        %1080 = vmatpush.msra.mxu0 0.0
        %1081 = vmatpush.msra.mxu0 0.0
        %1082 = vmatpush.msra.mxu0 0.0
        %1083 = vmatpush.msra.mxu0 0.0
        %1084 = vmatpush.msra.mxu0 0.0
        %1085 = vmatpush.msra.mxu0 0.0
        %1086 = vmatpush.msra.mxu0 0.0
        %1087 = vmatpush.msra.mxu0 0.0
        %1088 = vmatpush.msra.mxu0 0.0
        %1089 = vmatpush.msra.mxu0 0.0
        %1090 = vmatpush.msra.mxu0 0.0
        %1091 = vmatpush.msra.mxu0 %v1071
        %1092 = vmatmul.f32.gmra.mxu0 %v1074
        %v1093 = vpop.f32.mrf.mxu0
        %v1094 = vadd.f32 0.0, %v1093
        %1095 = vdwg.mxu0
        %1096 = vrot.lane.b32.xlu0 %v1030, 120
        %v1097 = vpop.permute.xlu0 %1096
        %1098 = vrot.lane.b32.xlu0 %v1027, 88
        %v1099 = vpop.permute.xlu0 %1098
        %v1100 = vsel %vm573, %v1097, 0
        %v1102 = vsel %vm573, %v1099, 0
        %1104 = vmatpush.xpose.msra.mxu0 0.0
        %1105 = vmatpush.xpose.msra.mxu0 0.0
        %1106 = vmatpush.xpose.msra.mxu0 0.0
        %1107 = vmatpush.xpose.msra.mxu0 0.0
        %1108 = vmatpush.xpose.msra.mxu0 0.0
        %1109 = vmatpush.xpose.msra.mxu0 0.0
        %1110 = vmatpush.xpose.msra.mxu0 0.0
        %1111 = vmatpush.xpose.msra.mxu0 0.0
        %1112 = vmatpush.xpose.msra.mxu0 0.0
        %1113 = vmatpush.xpose.msra.mxu0 0.0
        %1114 = vmatpush.xpose.msra.mxu0 0.0
        %1115 = vmatpush.xpose.msra.mxu0 0.0
        %1116 = vmatpush.xpose.msra.mxu0 0.0
        %1117 = vmatpush.xpose.msra.mxu0 0.0
        %1118 = vmatpush.xpose.msra.mxu0 0.0
        %1119 = vmatpush.xpose.msra.mxu0 %v1102
        %1120 = vmatmul.f32.gmra.mxu0 %v1100
        %v1121 = vpop.f32.mrf.mxu0
        %v1122 = vadd.f32 %v568, %v1121
        %1123 = vdwg.mxu0
        %v1124 = vsel %vm573, %v1122, -inf
        %1125 = vmax.xlane.f32.xlu0 %v1124
        %v1126 = vpop.xlane.xlu0 %1125
        %v1127 = vsub.f32 %v1122, %v1126
        %v1128 = vmul.f32 %v1127, 1.442695
        %v1129 = vpow.pop %v1128
        %v1130 = vsel %vm573, %v1129, 0.0
        %1131 = vadd.xlane.f32.xlu0 %v1130
        %v1132 = vpop.xlane.xlu0 %1131
        %v1133 = vrcp.pop %v1132
        %v1134 = vmul.f32 %v1129, %v1133
        %1135 = vrot.lane.b32.xlu0 %v1027, 56
        %v1136 = vpop.permute.xlu0 %1135
        %v1139 = vsel %vm573, %v1134, 0
        %1141 = vmatpush.msra.mxu0 0.0
        %1142 = vmatpush.msra.mxu0 0.0
        %1143 = vmatpush.msra.mxu0 0.0
        %1144 = vmatpush.msra.mxu0 0.0
        %1145 = vmatpush.msra.mxu0 0.0
        %1146 = vmatpush.msra.mxu0 0.0
        %1147 = vmatpush.msra.mxu0 0.0
        %1148 = vmatpush.msra.mxu0 0.0
        %1149 = vmatpush.msra.mxu0 0.0
        %1150 = vmatpush.msra.mxu0 0.0
        %1151 = vmatpush.msra.mxu0 0.0
        %1152 = vmatpush.msra.mxu0 0.0
        %1153 = vmatpush.msra.mxu0 0.0
        %1154 = vmatpush.msra.mxu0 0.0
        %1155 = vmatpush.msra.mxu0 0.0
        %1156 = vmatpush.msra.mxu0 %v1136
        %1157 = vmatmul.f32.gmra.mxu0 %v1139
        %v1158 = vpop.f32.mrf.mxu0
        %v1159 = vadd.f32 0.0, %v1158
        %1160 = vdwg.mxu0
        %1161 = vrot.lane.b32.xlu0 %v1030, 112
        %v1162 = vpop.permute.xlu0 %1161
        %1163 = vrot.lane.b32.xlu0 %v1027, 80
        %v1164 = vpop.permute.xlu0 %1163
        %v1165 = vsel %vm573, %v1162, 0
        %v1167 = vsel %vm573, %v1164, 0
        %1169 = vmatpush.xpose.msra.mxu0 0.0
        %1170 = vmatpush.xpose.msra.mxu0 0.0
        %1171 = vmatpush.xpose.msra.mxu0 0.0
        %1172 = vmatpush.xpose.msra.mxu0 0.0
        %1173 = vmatpush.xpose.msra.mxu0 0.0
        %1174 = vmatpush.xpose.msra.mxu0 0.0
        %1175 = vmatpush.xpose.msra.mxu0 0.0
        %1176 = vmatpush.xpose.msra.mxu0 0.0
        %1177 = vmatpush.xpose.msra.mxu0 0.0
        %1178 = vmatpush.xpose.msra.mxu0 0.0
        %1179 = vmatpush.xpose.msra.mxu0 0.0
        %1180 = vmatpush.xpose.msra.mxu0 0.0
        %1181 = vmatpush.xpose.msra.mxu0 0.0
        %1182 = vmatpush.xpose.msra.mxu0 0.0
        %1183 = vmatpush.xpose.msra.mxu0 0.0
        %1184 = vmatpush.xpose.msra.mxu0 %v1167
        %1185 = vmatmul.f32.gmra.mxu0 %v1165
        %v1186 = vpop.f32.mrf.mxu0
        %v1187 = vadd.f32 %v568, %v1186
        %1188 = vdwg.mxu0
        %v1189 = vsel %vm573, %v1187, -inf
        %1190 = vmax.xlane.f32.xlu0 %v1189
        %v1191 = vpop.xlane.xlu0 %1190
        %v1192 = vsub.f32 %v1187, %v1191
        %v1193 = vmul.f32 %v1192, 1.442695
        %v1194 = vpow.pop %v1193
        %v1195 = vsel %vm573, %v1194, 0.0
        %1196 = vadd.xlane.f32.xlu0 %v1195
        %v1197 = vpop.xlane.xlu0 %1196
        %v1198 = vrcp.pop %v1197
        %v1199 = vmul.f32 %v1194, %v1198
        %1200 = vrot.lane.b32.xlu0 %v1027, 48
        %v1201 = vpop.permute.xlu0 %1200
        %v1204 = vsel %vm573, %v1199, 0
        %1206 = vmatpush.msra.mxu0 0.0
        %1207 = vmatpush.msra.mxu0 0.0
        %1208 = vmatpush.msra.mxu0 0.0
        %1209 = vmatpush.msra.mxu0 0.0
        %1210 = vmatpush.msra.mxu0 0.0
        %1211 = vmatpush.msra.mxu0 0.0
        %1212 = vmatpush.msra.mxu0 0.0
        %1213 = vmatpush.msra.mxu0 0.0
        %1214 = vmatpush.msra.mxu0 0.0
        %1215 = vmatpush.msra.mxu0 0.0
        %1216 = vmatpush.msra.mxu0 0.0
        %1217 = vmatpush.msra.mxu0 0.0
        %1218 = vmatpush.msra.mxu0 0.0
        %1219 = vmatpush.msra.mxu0 0.0
        %1220 = vmatpush.msra.mxu0 0.0
        %1221 = vmatpush.msra.mxu0 %v1201
        %1222 = vmatmul.f32.gmra.mxu0 %v1204
        %v1223 = vpop.f32.mrf.mxu0
        %v1224 = vadd.f32 0.0, %v1223
        %1225 = vdwg.mxu0
        %1226 = vrot.lane.b32.xlu0 %v1030, 104
        %v1227 = vpop.permute.xlu0 %1226
        %1228 = vrot.lane.b32.xlu0 %v1027, 72
        %v1229 = vpop.permute.xlu0 %1228
        %v1230 = vsel %vm573, %v1227, 0
        %v1232 = vsel %vm573, %v1229, 0
        %1234 = vmatpush.xpose.msra.mxu0 0.0
        %1235 = vmatpush.xpose.msra.mxu0 0.0
        %1236 = vmatpush.xpose.msra.mxu0 0.0
        %1237 = vmatpush.xpose.msra.mxu0 0.0
        %1238 = vmatpush.xpose.msra.mxu0 0.0
        %1239 = vmatpush.xpose.msra.mxu0 0.0
        %1240 = vmatpush.xpose.msra.mxu0 0.0
        %1241 = vmatpush.xpose.msra.mxu0 0.0
        %1242 = vmatpush.xpose.msra.mxu0 0.0
        %1243 = vmatpush.xpose.msra.mxu0 0.0
        %1244 = vmatpush.xpose.msra.mxu0 0.0
        %1245 = vmatpush.xpose.msra.mxu0 0.0
        %1246 = vmatpush.xpose.msra.mxu0 0.0
        %1247 = vmatpush.xpose.msra.mxu0 0.0
        %1248 = vmatpush.xpose.msra.mxu0 0.0
        %1249 = vmatpush.xpose.msra.mxu0 %v1232
        %1250 = vmatmul.f32.gmra.mxu0 %v1230
        %v1251 = vpop.f32.mrf.mxu0
        %v1252 = vadd.f32 %v568, %v1251
        %1253 = vdwg.mxu0
        %v1254 = vsel %vm573, %v1252, -inf
        %1255 = vmax.xlane.f32.xlu0 %v1254
        %v1256 = vpop.xlane.xlu0 %1255
        %v1257 = vsub.f32 %v1252, %v1256
        %v1258 = vmul.f32 %v1257, 1.442695
        %v1259 = vpow.pop %v1258
        %v1260 = vsel %vm573, %v1259, 0.0
        %1261 = vadd.xlane.f32.xlu0 %v1260
        %v1262 = vpop.xlane.xlu0 %1261
        %v1263 = vrcp.pop %v1262
        %v1264 = vmul.f32 %v1259, %v1263
        %1265 = vrot.lane.b32.xlu0 %v1027, 40
        %v1266 = vpop.permute.xlu0 %1265
        %v1269 = vsel %vm573, %v1264, 0
        %1271 = vmatpush.msra.mxu0 0.0
        %1272 = vmatpush.msra.mxu0 0.0
        %1273 = vmatpush.msra.mxu0 0.0
        %1274 = vmatpush.msra.mxu0 0.0
        %1275 = vmatpush.msra.mxu0 0.0
        %1276 = vmatpush.msra.mxu0 0.0
        %1277 = vmatpush.msra.mxu0 0.0
        %1278 = vmatpush.msra.mxu0 0.0
        %1279 = vmatpush.msra.mxu0 0.0
        %1280 = vmatpush.msra.mxu0 0.0
        %1281 = vmatpush.msra.mxu0 0.0
        %1282 = vmatpush.msra.mxu0 0.0
        %1283 = vmatpush.msra.mxu0 0.0
        %1284 = vmatpush.msra.mxu0 0.0
        %1285 = vmatpush.msra.mxu0 0.0
        %1286 = vmatpush.msra.mxu0 %v1266
        %1287 = vmatmul.f32.gmra.mxu0 %v1269
        %v1288 = vpop.f32.mrf.mxu0
        %v1289 = vadd.f32 0.0, %v1288
        %1290 = vdwg.mxu0
        %1292 = vrot.lane.b32.xlu0 %v1159, 8
        %v1293 = vpop.permute.xlu0 %1292
        %1296 = vrot.lane.b32.xlu0 %v1224, 16
        %v1297 = vpop.permute.xlu0 %1296
        %1300 = vrot.lane.b32.xlu0 %v1289, 24
        %v1301 = vpop.permute.xlu0 %1300
        %v1303 = vsel %vm573, %v1094, %v1293
        %v1304 = vsel %vm844, %v1303, %v1297
        %v1305 = vsel %vm846, %v1304, %v1301
        %v1306 = vpack.c.bf16 %v1305, %v1305
        %v1308 = vperm.slane %v986, 0
        %v1314 = vunpack.c.l.b16 %v981
        %v1315 = vunpack.c.l.b16 %v982
        %v1316 = vunpack.c.l.b16 %v983
        %v1317 = vunpack.c.l.b16 %v984
        %v1318 = vpack.c.b16 %v1315, %v1314
        %v1319 = vpack.c.b16 %v1317, %v1316
        %v1323 = vsel %vm549, %v1306, 0
        %1325 = vmatpush.bf16.msra.mxu0 0
        %1326 = vmatpush.bf16.msra.mxu0 0
        %1327 = vmatpush.bf16.msra.mxu0 0
        %1328 = vmatpush.bf16.msra.mxu0 0
        %1329 = vmatpush.bf16.msra.mxu0 0
        %1330 = vmatpush.bf16.msra.mxu0 0
        %1331 = vmatpush.bf16.msra.mxu0 %v1319
        %1332 = vmatpush.bf16.msra.mxu0 %v1318
        %1333 = vmatmul.bf16.gmra.mxu0 %v1323
        %v1334 = vpop.f32.mrf.mxu0
        %v1335 = vadd.f32 %v1308, %v1334
        %v1336 = vpop.f32.mrf.mxu0
        %1337 = vdwg.mxu0
        %v1338 = vadd.f32 %v972, %v1335
        %v1339 = vsel %vm549, %v1338, 0.0
        %1340 = vadd.xlane.f32.xlu0 %v1339
        %v1341 = vpop.xlane.xlu0 %1340
        %v1342 = vmul.f32 %v1341, %v890
        %v1343 = vsub.f32 %v1338, %v1342
        %v1344 = vmul.f32 %v1343, %v1343
        %v1345 = vsel %vm549, %v1344, 0.0
        %1346 = vadd.xlane.f32.xlu0 %v1345
        %v1347 = vpop.xlane.xlu0 %1346
        %v1348 = vmul.f32 %v1347, %v890
        %v1349 = vadd.f32 %v1348, 1e-05
        %v1350 = vrsqrt.pop %v1349
        %v1351 = vmul.f32 %v1350, %v1349
        %v1352 = vmul.f32 %v1351, %v1350
        %v1353 = vmul.f32 0.5, %v1352
        %v1354 = vsub.f32 1.5, %v1353
        %v1355 = vmul.f32 %v1350, %v1354
        %vm1356 = vweird.f32 %v1349
        %vm1357 = vweird.f32 %v1350
        %vm1358 = vmor %vm1356, %vm1357
        %v1359 = vsel %vm1358, %v1350, %v1355
        %v1360 = vmul.f32 %v1343, %v1359
        %v1361 = vperm.slane %v995, 0
        %v1362 = vmul.f32 %v1360, %v1361
        %v1363 = vperm.slane %v997, 0
        %v1364 = vadd.f32 %v1362, %v1363
        %v1365 = vpack.c.bf16 %v1364, %v1364
        %v1367 = vperm.slane %v993, 0
        %v1373 = vunpack.c.l.b16 %v988
        %v1374 = vunpack.c.l.b16 %v989
        %v1375 = vunpack.c.l.b16 %v990
        %v1376 = vunpack.c.l.b16 %v991
        %v1377 = vpack.c.b16 %v1374, %v1373
        %v1378 = vpack.c.b16 %v1376, %v1375
        %v1382 = vsel %vm549, %v1365, 0
        %1384 = vmatpush.bf16.msra.mxu0 0
        %1385 = vmatpush.bf16.msra.mxu0 0
        %1386 = vmatpush.bf16.msra.mxu0 0
        %1387 = vmatpush.bf16.msra.mxu0 0
        %1388 = vmatpush.bf16.msra.mxu0 0
        %1389 = vmatpush.bf16.msra.mxu0 0
        %1390 = vmatpush.bf16.msra.mxu0 %v1378
        %1391 = vmatpush.bf16.msra.mxu0 %v1377
        %1392 = vmatmul.bf16.gmra.mxu0 %v1382
        %v1393 = vpop.f32.mrf.mxu0
        %v1394 = vadd.f32 %v1367, %v1393
        %v1395 = vpop.f32.mrf.mxu0
        %1396 = vdwg.mxu0
        %v1397 = vadd.f32 %v1364, %v1394
        %v1398 = vsel %vm549, %v1397, 0.0
        %1399 = vadd.xlane.f32.xlu0 %v1398
        %v1400 = vpop.xlane.xlu0 %1399
        %v1401 = vmul.f32 %v1400, %v890
        %v1402 = vsub.f32 %v1397, %v1401
        %v1403 = vmul.f32 %v1402, %v1402
        %v1404 = vsel %vm549, %v1403, 0.0
        %1405 = vadd.xlane.f32.xlu0 %v1404
        %v1406 = vpop.xlane.xlu0 %1405
        %v1407 = vmul.f32 %v1406, %v890
        %v1408 = vadd.f32 %v1407, 1e-05
        %v1409 = vrsqrt.pop %v1408
        %v1410 = vmul.f32 %v1409, %v1408
        %v1411 = vmul.f32 %v1410, %v1409
        %v1412 = vmul.f32 0.5, %v1411
        %v1413 = vsub.f32 1.5, %v1412
        %v1414 = vmul.f32 %v1409, %v1413
        %vm1415 = vweird.f32 %v1408
        %vm1416 = vweird.f32 %v1409
        %vm1417 = vmor %vm1415, %vm1416
        %v1418 = vsel %vm1417, %v1409, %v1414
        %v1419 = vmul.f32 %v1402, %v1418
        %v1420 = vperm.slane %v995, 1
        %v1421 = vmul.f32 %v1419, %v1420
        %v1422 = vperm.slane %v997, 1
        %v1423 = vadd.f32 %v1421, %v1422
        %1424 = vst.msk [vmem:[%s510] sm:$0xff] %vm549, %v1423
        %s1425 = sand.u32 %s261, 1
        %s1426 = scalar_lea.sflag [#allocation4], %s1425
        %s1427 = sand.u32 %s261, 1
        %s1428 = smul.addr %s1427, 8
        %s1429 = scalar_lea.vmem [#allocation16], %s1428
        // Predicated region
        $region93: #{tpu_custom_call.1} parent=59 // pred_check
          %p1430 = pneg %p271
        $region94: #{tpu_custom_call.1} parent=59 // pred_check_branch
          %1432 = sbr.rel (%p1430) target = $region96
        $region95: #{tpu_custom_call.1} parent=59 // pred_region
          %1434 = vsyncadd %s1426, 0
          %s1435 = smul.addr %s33, 8
          %s1436 = scalar_lea.hbm %s10, %s1435
          %s1438 = sshll.u32 %s1429, 4
          %s1439 = int_to_ptr.vmem [resolvable:$true] %s1438
          %s1440 = sshll.u32 %s1436, 4
          %s1441 = int_to_ptr.hbm [resolvable:$true] %s1440
          %1443 = dma.vmem_to_hbm [thread:$0]  %s1439, 128, %s1441, %s1426
        $region96: #{tpu_custom_call.1} parent=59 // pred_fallthru
          _
      $region60: #{tpu_custom_call.1} parent=5 // pred_fallthru
        _
      %p1444 = scmp.le.s32.totalorder 2, %s28
      // Predicated region
      $region97: #{tpu_custom_call.1} parent=5 // pred_check
        %p1445 = pneg %p1444
      $region98: #{tpu_custom_call.1} parent=5 // pred_check_branch
        %1447 = sbr.rel (%p1445) target = $region100
      $region99: #{tpu_custom_call.1} parent=5 // pred_region
        %s1448 = ssub.s32 %s28, 2
        // Predicated region
        $region101: #{tpu_custom_call.1} parent=99 // pred_check
          %p1449 = pneg %p277
        $region102: #{tpu_custom_call.1} parent=99 // pred_check_branch
          %1451 = sbr.rel (%p1449) target = $region104
        $region103: #{tpu_custom_call.1} parent=99 // pred_region
          %s1452 = sand.u32 %s262, 1
          %s1453 = scalar_lea.sflag [#allocation4], %s1452
          %s1454 = sand.u32 %s262, 1
          %s1455 = smul.addr %s1454, 8
          %s1456 = scalar_lea.vmem [#allocation16], %s1455
          %1458 = dma.done %s1453, 128
        $region104: #{tpu_custom_call.1} parent=99 // pred_fallthru
          _
      $region100: #{tpu_custom_call.1} parent=5 // pred_fallthru
        _
    $region6: #{tpu_custom_call.1} parent=1 // loop_footer
      %s32 = sadd.s32 1, %s28
    $region7: #{tpu_custom_call.1} parent=1 // loop_footer_branch
      %27 = sbr.rel target = $region3
    $region8: #{tpu_custom_call.1} parent=1 // loop_exit
      _
    %1459 = vsyncpa [#allocation3], 1
    %s1460 = scalar_lea.sflag [#allocation3], 1
    %1461 = vsyncpa %s1460, 1
    %1462 = vsyncpa [#allocation6], 1
    %s1463 = scalar_lea.sflag [#allocation6], 1
    %1464 = vsyncpa %s1463, 1
    %1465 = vsyncpa [#allocation9], 1
    %1466 = vsyncpa [#allocation12], 1
    %1467 = vsyncpa [#allocation15], 1
    %1468 = vsyncpa [#allocation4], 1
    %s1469 = scalar_lea.sflag [#allocation4], 1
    %1470 = vsyncpa %s1469, 1

</llo_original>
